<compile_context>
chip_gen: v5e
topology: v5e:2x2
jax: 0.10.0
libtpu: 0.0.40
codegen_flags: <defaults>
</compile_context>

<pallas_src>
import functools

import jax
import jax.numpy as jnp
from jax.experimental import pallas as pl
from jax.experimental.pallas import tpu as pltpu

EPS = 1e-5


# ---------------------------------------------------------------------------
# Fused ResBlockP Pallas kernel
# ---------------------------------------------------------------------------
def _make_resblock_kernel(taps1, taps2, n_acc, wo, wg, off, l2, cout):
    """taps1/taps2: static flat row offsets of the 9 conv taps.
    taps1[4] (centre tap) doubles as the strided input slab of the 1x1
    shortcut conv, so no separate shortcut input tensor is needed."""

    def kernel(planes_ref, w1_ref, w2_ref, ws_ref, b1_ref, b2_ref,
               o_ref, pf32_ref, y1_ref):
        f32 = jnp.float32
        bf16 = jnp.bfloat16

        # Stage the bf16 phase-plane block to f32 VMEM once (aligned full-block
        # copy) so every tap slab below is a plain 32-bit row-offset load, no
        # packed-bf16 sub-word slicing at odd row offsets.
        pf32_ref[...] = planes_ref[0].astype(f32)

        # ---- conv1 (3x3, stride s) + BN1 + ReLU  and  1x1 shortcut + BNs ----
        acc1 = None
        acc2 = None
        for t, base in enumerate(taps1):
            lhs = pf32_ref[pl.ds(base, n_acc), :].astype(bf16)   # (n_acc, Cin)
            d = jnp.dot(lhs, w1_ref[t], preferred_element_type=f32)
            acc1 = d if acc1 is None else acc1 + d
            if t == 4:        # centre tap == the strided 1x1-shortcut input
                acc2 = jnp.dot(lhs, ws_ref[...], preferred_element_type=f32)
        y1 = jnp.maximum(acc1 + b1_ref[...], 0.0)
        # Zero the 2 junk columns of every row: they become exactly the
        # zero-padding ring conv2 expects.
        col = jax.lax.broadcasted_iota(jnp.int32, (n_acc, 1), 0) % wg
        y1 = jnp.where(col < wo, y1, 0.0)

        # Place y1 into the padded-grid VMEM scratch (never touches HBM).
        y1_ref[pl.ds(0, off), :] = jnp.zeros((off, cout), f32)
        y1_ref[pl.ds(off, n_acc), :] = y1                 # off is 8-aligned
        tail = l2 - off - n_acc
        y1_ref[pl.ds(off + n_acc, tail), :] = jnp.zeros((tail, cout), f32)

        # ---- conv2 (3x3) + BN2,  residual add,  final ReLU -------------------
        for t, base in enumerate(taps2):
            lhs = y1_ref[pl.ds(base, n_acc), :].astype(bf16)     # (n_acc, Cout)
            acc2 = acc2 + jnp.dot(lhs, w2_ref[t], preferred_element_type=f32)
        y = jnp.maximum(acc2 + b2_ref[...], 0.0)
        o_ref[0] = y.astype(o_ref.dtype)

    return kernel


# ---------------------------------------------------------------------------
# Host-side glue
# ---------------------------------------------------------------------------
def _build_planes_3x3(x, stride, ho, wo, wg, dtype):
    """Phase-plane (space-to-depth) layout of the zero-padded NHWC input for a
    3x3/pad=1 conv with `stride`, flattened so that every one of the 9 taps is
    a contiguous (Ho*Wg, C) slab at a static row offset.

    Returns planes (N, P*HP*Wg, C) and the 9 static tap offsets."""
    n, h, w, c = x.shape
    s = stride
    xp = jnp.pad(x, ((0, 0), (1, 1), (1, 1), (0, 0)))
    npp = min(s, 3)                       # number of phases per spatial dim
    hp = ho + (2 // s) + 1                # plane rows (+1 safety row)
    planes = []
    for py in range(npp):
        for px in range(npp):
            p = xp[:, py::s, px::s, :][:, :hp, :wg, :]
            p = jnp.pad(p, ((0, 0), (0, hp - p.shape[1]),
                            (0, wg - p.shape[2]), (0, 0)))
            planes.append(p)
    planes = jnp.stack(planes, axis=1).astype(dtype)    # (N, P, HP, Wg, C)
    planes = planes.reshape(n, npp * npp * hp * wg, c)

    l1 = hp * wg
    taps = []
    for dy in range(3):
        for dx in range(3):
            p_idx = (dy % s) * npp + (dx % s)
            taps.append(p_idx * l1 + (dy // s) * wg + (dx // s))
    return planes, taps


def prepare_params(params):
    """Fold inference-mode BN scale into the conv weights, transpose to the
    (tap, Cin, Cout) matmul layout and cast to bf16 — once, outside jit."""
    def fold(g, b, m, v):
        s = g / jnp.sqrt(v + EPS)
        return s, b - m * s

    s1, b1 = fold(params["g1"], params["be1"], params["m1"], params["v1"])
    s2, b2 = fold(params["g2"], params["be2"], params["m2"], params["v2"])
    ss, bs = fold(params["gs"], params["bes"], params["ms"], params["vs"])

    def w3x3(w, scale):                   # (O, I, 3, 3) -> (9, I, O), scaled
        o, i, kh, kw = w.shape
        wm = jnp.transpose(w, (2, 3, 1, 0)).reshape(kh * kw, i, o)
        return (wm * scale).astype(jnp.bfloat16)

    ws = (jnp.transpose(params["ws"][:, :, 0, 0], (1, 0)) * ss)
    return {
        "w1": w3x3(params["w1"], s1),
        "w2": w3x3(params["w2"], s2),
        "ws": ws.astype(jnp.bfloat16),
        "b1": b1.reshape(1, -1).astype(jnp.float32),
        # conv2-BN bias and shortcut-BN bias both add into the final sum
        "b2": (b2 + bs).reshape(1, -1).astype(jnp.float32),
    }


def res_block_p(x_nchw, prep, stride):
    x = jnp.transpose(x_nchw, (0, 2, 3, 1))            # NHWC
    n, h, w, cin = x.shape
    cout = prep["w1"].shape[-1]
    s = stride

    ho = (h + 2 - 3) // s + 1
    wo = (w + 2 - 3) // s + 1
    wg = wo + 2                                         # width-padded grid
    n_acc = ho * wg                                     # pixel rows per image
    lead = (-(wg + 1)) % 8                              # align y1 interior to 8
    off = lead + wg + 1                                 # interior start (8-aligned)
    l2 = lead + (ho + 3) * wg                           # y1 scratch rows

    cdt = jnp.bfloat16
    planes, taps1 = _build_planes_3x3(x, s, ho, wo, wg, cdt)
    taps2 = [lead + dy * wg + dx for dy in range(3) for dx in range(3)]
    lp = planes.shape[1]

    kernel = _make_resblock_kernel(taps1, taps2, n_acc, wo, wg, off, l2, cout)

    flops = 2 * n * n_acc * cout * (9 * cin + 9 * cout + cin)
    bytes_accessed = (
        2 * (planes.size + prep["w1"].size + prep["w2"].size + prep["ws"].size)
        + 4 * (prep["b1"].size + prep["b2"].size + n * n_acc * cout))
    cost = pl.CostEstimate(flops=flops, transcendentals=0,
                           bytes_accessed=bytes_accessed)

    out = pl.pallas_call(
        kernel,
        out_shape=jax.ShapeDtypeStruct((n, n_acc, cout), jnp.float32),
        grid=(n,),
        in_specs=[
            pl.BlockSpec((1, lp, cin), lambda i: (i, 0, 0)),      # phase planes
            pl.BlockSpec((9, cin, cout), lambda i: (0, 0, 0)),    # W1 (scale-folded)
            pl.BlockSpec((9, cout, cout), lambda i: (0, 0, 0)),   # W2 (scale-folded)
            pl.BlockSpec((cin, cout), lambda i: (0, 0)),          # Ws (scale-folded)
            pl.BlockSpec((1, cout), lambda i: (0, 0)),            # b1
            pl.BlockSpec((1, cout), lambda i: (0, 0)),            # b2 + bs
        ],
        out_specs=pl.BlockSpec((1, n_acc, cout), lambda i: (i, 0, 0)),
        scratch_shapes=[
            pltpu.VMEM((lp, cin), jnp.float32),                   # staged planes
            pltpu.VMEM((l2, cout), jnp.float32),                  # y1 (padded grid)
        ],
        compiler_params=pltpu.CompilerParams(
            dimension_semantics=("parallel",),
            vmem_limit_bytes=32 * 1024 * 1024),
        cost_estimate=cost,
    )(planes, prep["w1"], prep["w2"], prep["ws"], prep["b1"], prep["b2"])

    out = out.reshape(n, ho, wg, cout)[:, :, :wo, :]    # drop 2 junk cols / row
    return jnp.transpose(out, (0, 3, 1, 2))             # back to NCHW


# ---------------------------------------------------------------------------
# Pure-JAX reference (lax.conv, f32) for correctness check
# ---------------------------------------------------------------------------
def reference(x, params, stride, eps=EPS):
    def conv(x, w, s, p):
        return jax.lax.conv_general_dilated(
            x, w, (s, s), [(p, p), (p, p)],
            dimension_numbers=("NCHW", "OIHW", "NCHW"))

    def bn(x, g, b, m, v):
        sc = g / jnp.sqrt(v + eps)
        return x * sc[None, :, None, None] + (b - m * sc)[None, :, None, None]

    r = conv(x, params["w1"], stride, 1)
    r = jnp.maximum(bn(r, params["g1"], params["be1"], params["m1"], params["v1"]), 0.0)
    r = conv(r, params["w2"], 1, 1)
    r = bn(r, params["g2"], params["be2"], params["m2"], params["v2"])
    s = conv(x, params["ws"], stride, 0)
    s = bn(s, params["gs"], params["bes"], params["ms"], params["vs"])
    return jnp.maximum(r + s, 0.0)


def init_params(key, cin, cout):
    ks = jax.random.split(key, 12)
    f32 = jnp.float32
    return {
        "w1": 0.1 * jax.random.normal(ks[0], (cout, cin, 3, 3), f32),
        "g1": 1.0 + 0.1 * jax.random.normal(ks[1], (cout,), f32),
        "be1": 0.1 * jax.random.normal(ks[2], (cout,), f32),
        "m1": 0.1 * jax.random.normal(ks[3], (cout,), f32),
        "v1": 1.0 + 0.1 * jax.random.uniform(ks[4], (cout,), f32),
        "w2": 0.1 * jax.random.normal(ks[5], (cout, cout, 3, 3), f32),
        "g2": 1.0 + 0.1 * jax.random.normal(ks[6], (cout,), f32),
        "be2": 0.1 * jax.random.normal(ks[7], (cout,), f32),
        "m2": 0.1 * jax.random.normal(ks[8], (cout,), f32),
        "v2": 1.0 + 0.1 * jax.random.uniform(ks[9], (cout,), f32),
        "ws": 0.1 * jax.random.normal(ks[10], (cout, cin, 1, 1), f32),
        "gs": jnp.ones((cout,), f32) * 1.05,
        "bes": jnp.full((cout,), 0.02, f32),
        "ms": jnp.full((cout,), -0.03, f32),
        "vs": jnp.ones((cout,), f32) * 1.1,
    }


if __name__ == "__main__":
    N, Cin, Cout, H, W, stride = 2, 4, 8, 16, 16, 2

    key = jax.random.PRNGKey(0)
    kx, kp = jax.random.split(key)
    x = jax.random.normal(kx, (N, Cin, H, W), jnp.float32)
    params = init_params(kp, Cin, Cout)

    prep = prepare_params(params)          # BN fold / transpose / bf16, outside jit
    fwd = jax.jit(functools.partial(res_block_p, stride=stride))
    out = jax.block_until_ready(fwd(x, prep))

    ref = reference(x, params, stride)
    assert out.shape == ref.shape, (out.shape, ref.shape)
    err = float(jnp.max(jnp.abs(out - ref)))
    # bf16 operands with f32 accumulation: allow bf16-level tolerance
    assert jnp.allclose(out, ref, atol=5e-2, rtol=5e-2), err

    print("KERNEL_OK")
</pallas_src>

<mosaic_0001>
module attributes {stable_mosaic.version = 11 : i64} {
  func.func @kernel(%arg0: i32, %arg1: memref<1x400x4xbf16, #tpu.memory_space<vmem>>, %arg2: memref<9x4x8xbf16, #tpu.memory_space<vmem>>, %arg3: memref<9x8x8xbf16, #tpu.memory_space<vmem>>, %arg4: memref<4x8xbf16, #tpu.memory_space<vmem>>, %arg5: memref<1x8xf32, #tpu.memory_space<vmem>>, %arg6: memref<1x8xf32, #tpu.memory_space<vmem>>, %arg7: memref<1x80x8xf32, #tpu.memory_space<vmem>>, %arg8: memref<400x4xf32, #tpu.memory_space<vmem>>, %arg9: memref<115x8xf32, #tpu.memory_space<vmem>>) attributes {dimension_semantics = [#tpu.dimension_semantics<parallel>], iteration_bounds = array<i64: 2>, scalar_prefetch = 0 : i64, scratch_operands = 2 : i64, tpu.core_type = #tpu.core_type<tc>, window_params = [{transform_indices = @transform_0, window_bounds = array<i64: 1, 400, 4>}, {pipeline_mode = #tpu.pipeline_mode<synchronous>, transform_indices = @transform_1, window_bounds = array<i64: 9, 4, 8>}, {pipeline_mode = #tpu.pipeline_mode<synchronous>, transform_indices = @transform_2, window_bounds = array<i64: 9, 8, 8>}, {pipeline_mode = #tpu.pipeline_mode<synchronous>, transform_indices = @transform_3, window_bounds = array<i64: 4, 8>}, {pipeline_mode = #tpu.pipeline_mode<synchronous>, transform_indices = @transform_4, window_bounds = array<i64: 1, 8>}, {pipeline_mode = #tpu.pipeline_mode<synchronous>, transform_indices = @transform_5, window_bounds = array<i64: 1, 8>}, {transform_indices = @transform_6, window_bounds = array<i64: 1, 80, 8>}]} {
    %c0 = arith.constant 0 : index
    %c0_0 = arith.constant 0 : index
    %c0_1 = arith.constant 0 : index
    %0 = vector.load %arg1[%c0, %c0_0, %c0_1] : memref<1x400x4xbf16, #tpu.memory_space<vmem>>, vector<1x400x4xbf16>
    %1 = vector.shape_cast %0 : vector<1x400x4xbf16> to vector<400x4xbf16>
    %2 = arith.extf %1 : vector<400x4xbf16> to vector<400x4xf32>
    %c0_2 = arith.constant 0 : index
    %c0_3 = arith.constant 0 : index
    %3 = vector.load %arg8[%c0_2, %c0_3] : memref<400x4xf32, #tpu.memory_space<vmem>>, vector<400x4xf32>
    tpu.vector_store %arg8[%c0_2, %c0_3], %2 {strides = array<i32>} : memref<400x4xf32, #tpu.memory_space<vmem>>, vector<400x4xf32>,
    %c0_4 = arith.constant 0 : index
    %c0_5 = arith.constant 0 : index
    %4 = vector.load %arg8[%c0_4, %c0_5] : memref<400x4xf32, #tpu.memory_space<vmem>>, vector<80x4xf32>
    %5 = arith.truncf %4 : vector<80x4xf32> to vector<80x4xbf16>
    %c0_6 = arith.constant 0 : index
    %c0_7 = arith.constant 0 : index
    %c0_8 = arith.constant 0 : index
    %6 = vector.load %arg2[%c0_6, %c0_7, %c0_8] : memref<9x4x8xbf16, #tpu.memory_space<vmem>>, vector<1x4x8xbf16>
    %7 = vector.shape_cast %6 : vector<1x4x8xbf16> to vector<4x8xbf16>
    %cst = arith.constant dense<0.000000e+00> : vector<80x8xf32>
    %8 = tpu.matmul %5, %7, %cst {dimension_numbers = #tpu.dot_dimension_numbers<[1], [0], [0], [1], [0, 0, 1, 1], [], []>} : vector<80x4xbf16>, vector<4x8xbf16>, vector<80x8xf32> -> vector<80x8xf32>
    %c100 = arith.constant 100 : index
    %c0_9 = arith.constant 0 : index
    %9 = vector.load %arg8[%c100, %c0_9] : memref<400x4xf32, #tpu.memory_space<vmem>>, vector<80x4xf32>
    %10 = arith.truncf %9 : vector<80x4xf32> to vector<80x4xbf16>
    %c1 = arith.constant 1 : index
    %c0_10 = arith.constant 0 : index
    %c0_11 = arith.constant 0 : index
    %11 = vector.load %arg2[%c1, %c0_10, %c0_11] : memref<9x4x8xbf16, #tpu.memory_space<vmem>>, vector<1x4x8xbf16>
    %12 = vector.shape_cast %11 : vector<1x4x8xbf16> to vector<4x8xbf16>
    %cst_12 = arith.constant dense<0.000000e+00> : vector<80x8xf32>
    %13 = tpu.matmul %10, %12, %cst_12 {dimension_numbers = #tpu.dot_dimension_numbers<[1], [0], [0], [1], [0, 0, 1, 1], [], []>} : vector<80x4xbf16>, vector<4x8xbf16>, vector<80x8xf32> -> vector<80x8xf32>
    %14 = arith.addf %8, %13 : vector<80x8xf32>
    %c1_13 = arith.constant 1 : index
    %c0_14 = arith.constant 0 : index
    %15 = vector.load %arg8[%c1_13, %c0_14] : memref<400x4xf32, #tpu.memory_space<vmem>>, vector<80x4xf32>
    %16 = arith.truncf %15 : vector<80x4xf32> to vector<80x4xbf16>
    %c2 = arith.constant 2 : index
    %c0_15 = arith.constant 0 : index
    %c0_16 = arith.constant 0 : index
    %17 = vector.load %arg2[%c2, %c0_15, %c0_16] : memref<9x4x8xbf16, #tpu.memory_space<vmem>>, vector<1x4x8xbf16>
    %18 = vector.shape_cast %17 : vector<1x4x8xbf16> to vector<4x8xbf16>
    %cst_17 = arith.constant dense<0.000000e+00> : vector<80x8xf32>
    %19 = tpu.matmul %16, %18, %cst_17 {dimension_numbers = #tpu.dot_dimension_numbers<[1], [0], [0], [1], [0, 0, 1, 1], [], []>} : vector<80x4xbf16>, vector<4x8xbf16>, vector<80x8xf32> -> vector<80x8xf32>
    %20 = arith.addf %14, %19 : vector<80x8xf32>
    %c200 = arith.constant 200 : index
    %c0_18 = arith.constant 0 : index
    %21 = vector.load %arg8[%c200, %c0_18] : memref<400x4xf32, #tpu.memory_space<vmem>>, vector<80x4xf32>
    %22 = arith.truncf %21 : vector<80x4xf32> to vector<80x4xbf16>
    %c3 = arith.constant 3 : index
    %c0_19 = arith.constant 0 : index
    %c0_20 = arith.constant 0 : index
    %23 = vector.load %arg2[%c3, %c0_19, %c0_20] : memref<9x4x8xbf16, #tpu.memory_space<vmem>>, vector<1x4x8xbf16>
    %24 = vector.shape_cast %23 : vector<1x4x8xbf16> to vector<4x8xbf16>
    %cst_21 = arith.constant dense<0.000000e+00> : vector<80x8xf32>
    %25 = tpu.matmul %22, %24, %cst_21 {dimension_numbers = #tpu.dot_dimension_numbers<[1], [0], [0], [1], [0, 0, 1, 1], [], []>} : vector<80x4xbf16>, vector<4x8xbf16>, vector<80x8xf32> -> vector<80x8xf32>
    %26 = arith.addf %20, %25 : vector<80x8xf32>
    %c300 = arith.constant 300 : index
    %c0_22 = arith.constant 0 : index
    %27 = vector.load %arg8[%c300, %c0_22] : memref<400x4xf32, #tpu.memory_space<vmem>>, vector<80x4xf32>
    %28 = arith.truncf %27 : vector<80x4xf32> to vector<80x4xbf16>
    %c4 = arith.constant 4 : index
    %c0_23 = arith.constant 0 : index
    %c0_24 = arith.constant 0 : index
    %29 = vector.load %arg2[%c4, %c0_23, %c0_24] : memref<9x4x8xbf16, #tpu.memory_space<vmem>>, vector<1x4x8xbf16>
    %30 = vector.shape_cast %29 : vector<1x4x8xbf16> to vector<4x8xbf16>
    %cst_25 = arith.constant dense<0.000000e+00> : vector<80x8xf32>
    %31 = tpu.matmul %28, %30, %cst_25 {dimension_numbers = #tpu.dot_dimension_numbers<[1], [0], [0], [1], [0, 0, 1, 1], [], []>} : vector<80x4xbf16>, vector<4x8xbf16>, vector<80x8xf32> -> vector<80x8xf32>
    %32 = arith.addf %26, %31 : vector<80x8xf32>
    %c0_26 = arith.constant 0 : index
    %c0_27 = arith.constant 0 : index
    %33 = vector.load %arg4[%c0_26, %c0_27] : memref<4x8xbf16, #tpu.memory_space<vmem>>, vector<4x8xbf16>
    %cst_28 = arith.constant dense<0.000000e+00> : vector<80x8xf32>
    %34 = tpu.matmul %28, %33, %cst_28 {dimension_numbers = #tpu.dot_dimension_numbers<[1], [0], [0], [1], [0, 0, 1, 1], [], []>} : vector<80x4xbf16>, vector<4x8xbf16>, vector<80x8xf32> -> vector<80x8xf32>
    %c201 = arith.constant 201 : index
    %c0_29 = arith.constant 0 : index
    %35 = vector.load %arg8[%c201, %c0_29] : memref<400x4xf32, #tpu.memory_space<vmem>>, vector<80x4xf32>
    %36 = arith.truncf %35 : vector<80x4xf32> to vector<80x4xbf16>
    %c5 = arith.constant 5 : index
    %c0_30 = arith.constant 0 : index
    %c0_31 = arith.constant 0 : index
    %37 = vector.load %arg2[%c5, %c0_30, %c0_31] : memref<9x4x8xbf16, #tpu.memory_space<vmem>>, vector<1x4x8xbf16>
    %38 = vector.shape_cast %37 : vector<1x4x8xbf16> to vector<4x8xbf16>
    %cst_32 = arith.constant dense<0.000000e+00> : vector<80x8xf32>
    %39 = tpu.matmul %36, %38, %cst_32 {dimension_numbers = #tpu.dot_dimension_numbers<[1], [0], [0], [1], [0, 0, 1, 1], [], []>} : vector<80x4xbf16>, vector<4x8xbf16>, vector<80x8xf32> -> vector<80x8xf32>
    %40 = arith.addf %32, %39 : vector<80x8xf32>
    %c10 = arith.constant 10 : index
    %c0_33 = arith.constant 0 : index
    %41 = vector.load %arg8[%c10, %c0_33] : memref<400x4xf32, #tpu.memory_space<vmem>>, vector<80x4xf32>
    %42 = arith.truncf %41 : vector<80x4xf32> to vector<80x4xbf16>
    %c6 = arith.constant 6 : index
    %c0_34 = arith.constant 0 : index
    %c0_35 = arith.constant 0 : index
    %43 = vector.load %arg2[%c6, %c0_34, %c0_35] : memref<9x4x8xbf16, #tpu.memory_space<vmem>>, vector<1x4x8xbf16>
    %44 = vector.shape_cast %43 : vector<1x4x8xbf16> to vector<4x8xbf16>
    %cst_36 = arith.constant dense<0.000000e+00> : vector<80x8xf32>
    %45 = tpu.matmul %42, %44, %cst_36 {dimension_numbers = #tpu.dot_dimension_numbers<[1], [0], [0], [1], [0, 0, 1, 1], [], []>} : vector<80x4xbf16>, vector<4x8xbf16>, vector<80x8xf32> -> vector<80x8xf32>
    %46 = arith.addf %40, %45 : vector<80x8xf32>
    %c110 = arith.constant 110 : index
    %c0_37 = arith.constant 0 : index
    %47 = vector.load %arg8[%c110, %c0_37] : memref<400x4xf32, #tpu.memory_space<vmem>>, vector<80x4xf32>
    %48 = arith.truncf %47 : vector<80x4xf32> to vector<80x4xbf16>
    %c7 = arith.constant 7 : index
    %c0_38 = arith.constant 0 : index
    %c0_39 = arith.constant 0 : index
    %49 = vector.load %arg2[%c7, %c0_38, %c0_39] : memref<9x4x8xbf16, #tpu.memory_space<vmem>>, vector<1x4x8xbf16>
    %50 = vector.shape_cast %49 : vector<1x4x8xbf16> to vector<4x8xbf16>
    %cst_40 = arith.constant dense<0.000000e+00> : vector<80x8xf32>
    %51 = tpu.matmul %48, %50, %cst_40 {dimension_numbers = #tpu.dot_dimension_numbers<[1], [0], [0], [1], [0, 0, 1, 1], [], []>} : vector<80x4xbf16>, vector<4x8xbf16>, vector<80x8xf32> -> vector<80x8xf32>
    %52 = arith.addf %46, %51 : vector<80x8xf32>
    %c11 = arith.constant 11 : index
    %c0_41 = arith.constant 0 : index
    %53 = vector.load %arg8[%c11, %c0_41] : memref<400x4xf32, #tpu.memory_space<vmem>>, vector<80x4xf32>
    %54 = arith.truncf %53 : vector<80x4xf32> to vector<80x4xbf16>
    %c8 = arith.constant 8 : index
    %c0_42 = arith.constant 0 : index
    %c0_43 = arith.constant 0 : index
    %55 = vector.load %arg2[%c8, %c0_42, %c0_43] : memref<9x4x8xbf16, #tpu.memory_space<vmem>>, vector<1x4x8xbf16>
    %56 = vector.shape_cast %55 : vector<1x4x8xbf16> to vector<4x8xbf16>
    %cst_44 = arith.constant dense<0.000000e+00> : vector<80x8xf32>
    %57 = tpu.matmul %54, %56, %cst_44 {dimension_numbers = #tpu.dot_dimension_numbers<[1], [0], [0], [1], [0, 0, 1, 1], [], []>} : vector<80x4xbf16>, vector<4x8xbf16>, vector<80x8xf32> -> vector<80x8xf32>
    %58 = arith.addf %52, %57 : vector<80x8xf32>
    %c0_45 = arith.constant 0 : index
    %c0_46 = arith.constant 0 : index
    %59 = vector.load %arg5[%c0_45, %c0_46] : memref<1x8xf32, #tpu.memory_space<vmem>>, vector<1x8xf32>
    %60 = vector.broadcast %59 : vector<1x8xf32> to vector<80x8xf32>
    %61 = arith.addf %58, %60 : vector<80x8xf32>
    %cst_47 = arith.constant 0.000000e+00 : f32
    %62 = vector.broadcast %cst_47 : f32 to vector<80x8xf32>
    %63 = arith.maximumf %61, %62 : vector<80x8xf32>
    %64 = tpu.iota {dimensions = array<i32: 0>} : vector<80x1xi32>
    %c10_i32 = arith.constant 10 : i32
    %c0_i32 = arith.constant 0 : i32
    %65 = arith.cmpi eq, %c10_i32, %c0_i32 : i32
    %c1_i32 = arith.constant 1 : i32
    %66 = arith.select %65, %c1_i32, %c10_i32 : i32
    %67 = vector.broadcast %66 : i32 to vector<80x1xi32>
    %68 = arith.remsi %64, %67 : vector<80x1xi32>
    %c0_i32_48 = arith.constant 0 : i32
    %69 = vector.broadcast %c0_i32_48 : i32 to vector<80x1xi32>
    %70 = arith.cmpi ne, %68, %69 : vector<80x1xi32>
    %c0_i32_49 = arith.constant 0 : i32
    %71 = vector.broadcast %c0_i32_49 : i32 to vector<80x1xi32>
    %72 = arith.cmpi slt, %68, %71 : vector<80x1xi32>
    %c0_i32_50 = arith.constant 0 : i32
    %73 = arith.cmpi slt, %66, %c0_i32_50 : i32
    %74 = vector.broadcast %73 : i1 to vector<80x1xi1>
    %75 = vector.broadcast %74 : vector<80x1xi1> to vector<80x1xi1>
    %76 = arith.xori %72, %75 : vector<80x1xi1>
    %77 = arith.andi %76, %70 : vector<80x1xi1>
    %78 = vector.broadcast %66 : i32 to vector<80x1xi32>
    %79 = arith.addi %68, %78 : vector<80x1xi32>
    %80 = arith.select %77, %79, %68 : vector<80x1xi1>, vector<80x1xi32>
    %c8_i32 = arith.constant 8 : i32
    %81 = vector.broadcast %c8_i32 : i32 to vector<80x1xi32>
    %82 = arith.cmpi slt, %80, %81 : vector<80x1xi32>
    %cst_51 = arith.constant 0.000000e+00 : f32
    %83 = vector.shape_cast %82 : vector<80x1xi1> to vector<80x1xi1>
    %84 = vector.broadcast %83 : vector<80x1xi1> to vector<80x8xi1>
    %85 = vector.broadcast %cst_51 : f32 to vector<80x8xf32>
    %86 = arith.select %84, %63, %85 : vector<80x8xi1>, vector<80x8xf32>
    %cst_52 = arith.constant 0.000000e+00 : f32
    %87 = vector.broadcast %cst_52 : f32 to vector<16x8xf32>
    %c0_53 = arith.constant 0 : index
    %c0_54 = arith.constant 0 : index
    %88 = vector.load %arg9[%c0_53, %c0_54] : memref<115x8xf32, #tpu.memory_space<vmem>>, vector<16x8xf32>
    tpu.vector_store %arg9[%c0_53, %c0_54], %87 {strides = array<i32>} : memref<115x8xf32, #tpu.memory_space<vmem>>, vector<16x8xf32>,
    %c16 = arith.constant 16 : index
    %c0_55 = arith.constant 0 : index
    %89 = vector.load %arg9[%c16, %c0_55] : memref<115x8xf32, #tpu.memory_space<vmem>>, vector<80x8xf32>
    tpu.vector_store %arg9[%c16, %c0_55], %86 {strides = array<i32>} : memref<115x8xf32, #tpu.memory_space<vmem>>, vector<80x8xf32>,
    %cst_56 = arith.constant 0.000000e+00 : f32
    %90 = vector.broadcast %cst_56 : f32 to vector<19x8xf32>
    %c96 = arith.constant 96 : index
    %c0_57 = arith.constant 0 : index
    %91 = vector.load %arg9[%c96, %c0_57] : memref<115x8xf32, #tpu.memory_space<vmem>>, vector<19x8xf32>
    tpu.vector_store %arg9[%c96, %c0_57], %90 {strides = array<i32>} : memref<115x8xf32, #tpu.memory_space<vmem>>, vector<19x8xf32>,
    %c5_58 = arith.constant 5 : index
    %c0_59 = arith.constant 0 : index
    %92 = vector.load %arg9[%c5_58, %c0_59] : memref<115x8xf32, #tpu.memory_space<vmem>>, vector<80x8xf32>
    %93 = arith.truncf %92 : vector<80x8xf32> to vector<80x8xbf16>
    %c0_60 = arith.constant 0 : index
    %c0_61 = arith.constant 0 : index
    %c0_62 = arith.constant 0 : index
    %94 = vector.load %arg3[%c0_60, %c0_61, %c0_62] : memref<9x8x8xbf16, #tpu.memory_space<vmem>>, vector<1x8x8xbf16>
    %95 = vector.shape_cast %94 : vector<1x8x8xbf16> to vector<8x8xbf16>
    %cst_63 = arith.constant dense<0.000000e+00> : vector<80x8xf32>
    %96 = tpu.matmul %93, %95, %cst_63 {dimension_numbers = #tpu.dot_dimension_numbers<[1], [0], [0], [1], [0, 0, 1, 1], [], []>} : vector<80x8xbf16>, vector<8x8xbf16>, vector<80x8xf32> -> vector<80x8xf32>
    %97 = arith.addf %34, %96 : vector<80x8xf32>
    %c6_64 = arith.constant 6 : index
    %c0_65 = arith.constant 0 : index
    %98 = vector.load %arg9[%c6_64, %c0_65] : memref<115x8xf32, #tpu.memory_space<vmem>>, vector<80x8xf32>
    %99 = arith.truncf %98 : vector<80x8xf32> to vector<80x8xbf16>
    %c1_66 = arith.constant 1 : index
    %c0_67 = arith.constant 0 : index
    %c0_68 = arith.constant 0 : index
    %100 = vector.load %arg3[%c1_66, %c0_67, %c0_68] : memref<9x8x8xbf16, #tpu.memory_space<vmem>>, vector<1x8x8xbf16>
    %101 = vector.shape_cast %100 : vector<1x8x8xbf16> to vector<8x8xbf16>
    %cst_69 = arith.constant dense<0.000000e+00> : vector<80x8xf32>
    %102 = tpu.matmul %99, %101, %cst_69 {dimension_numbers = #tpu.dot_dimension_numbers<[1], [0], [0], [1], [0, 0, 1, 1], [], []>} : vector<80x8xbf16>, vector<8x8xbf16>, vector<80x8xf32> -> vector<80x8xf32>
    %103 = arith.addf %97, %102 : vector<80x8xf32>
    %c7_70 = arith.constant 7 : index
    %c0_71 = arith.constant 0 : index
    %104 = vector.load %arg9[%c7_70, %c0_71] : memref<115x8xf32, #tpu.memory_space<vmem>>, vector<80x8xf32>
    %105 = arith.truncf %104 : vector<80x8xf32> to vector<80x8xbf16>
    %c2_72 = arith.constant 2 : index
    %c0_73 = arith.constant 0 : index
    %c0_74 = arith.constant 0 : index
    %106 = vector.load %arg3[%c2_72, %c0_73, %c0_74] : memref<9x8x8xbf16, #tpu.memory_space<vmem>>, vector<1x8x8xbf16>
    %107 = vector.shape_cast %106 : vector<1x8x8xbf16> to vector<8x8xbf16>
    %cst_75 = arith.constant dense<0.000000e+00> : vector<80x8xf32>
    %108 = tpu.matmul %105, %107, %cst_75 {dimension_numbers = #tpu.dot_dimension_numbers<[1], [0], [0], [1], [0, 0, 1, 1], [], []>} : vector<80x8xbf16>, vector<8x8xbf16>, vector<80x8xf32> -> vector<80x8xf32>
    %109 = arith.addf %103, %108 : vector<80x8xf32>
    %c15 = arith.constant 15 : index
    %c0_76 = arith.constant 0 : index
    %110 = vector.load %arg9[%c15, %c0_76] : memref<115x8xf32, #tpu.memory_space<vmem>>, vector<80x8xf32>
    %111 = arith.truncf %110 : vector<80x8xf32> to vector<80x8xbf16>
    %c3_77 = arith.constant 3 : index
    %c0_78 = arith.constant 0 : index
    %c0_79 = arith.constant 0 : index
    %112 = vector.load %arg3[%c3_77, %c0_78, %c0_79] : memref<9x8x8xbf16, #tpu.memory_space<vmem>>, vector<1x8x8xbf16>
    %113 = vector.shape_cast %112 : vector<1x8x8xbf16> to vector<8x8xbf16>
    %cst_80 = arith.constant dense<0.000000e+00> : vector<80x8xf32>
    %114 = tpu.matmul %111, %113, %cst_80 {dimension_numbers = #tpu.dot_dimension_numbers<[1], [0], [0], [1], [0, 0, 1, 1], [], []>} : vector<80x8xbf16>, vector<8x8xbf16>, vector<80x8xf32> -> vector<80x8xf32>
    %115 = arith.addf %109, %114 : vector<80x8xf32>
    %c16_81 = arith.constant 16 : index
    %c0_82 = arith.constant 0 : index
    %116 = vector.load %arg9[%c16_81, %c0_82] : memref<115x8xf32, #tpu.memory_space<vmem>>, vector<80x8xf32>
    %117 = arith.truncf %116 : vector<80x8xf32> to vector<80x8xbf16>
    %c4_83 = arith.constant 4 : index
    %c0_84 = arith.constant 0 : index
    %c0_85 = arith.constant 0 : index
    %118 = vector.load %arg3[%c4_83, %c0_84, %c0_85] : memref<9x8x8xbf16, #tpu.memory_space<vmem>>, vector<1x8x8xbf16>
    %119 = vector.shape_cast %118 : vector<1x8x8xbf16> to vector<8x8xbf16>
    %cst_86 = arith.constant dense<0.000000e+00> : vector<80x8xf32>
    %120 = tpu.matmul %117, %119, %cst_86 {dimension_numbers = #tpu.dot_dimension_numbers<[1], [0], [0], [1], [0, 0, 1, 1], [], []>} : vector<80x8xbf16>, vector<8x8xbf16>, vector<80x8xf32> -> vector<80x8xf32>
    %121 = arith.addf %115, %120 : vector<80x8xf32>
    %c17 = arith.constant 17 : index
    %c0_87 = arith.constant 0 : index
    %122 = vector.load %arg9[%c17, %c0_87] : memref<115x8xf32, #tpu.memory_space<vmem>>, vector<80x8xf32>
    %123 = arith.truncf %122 : vector<80x8xf32> to vector<80x8xbf16>
    %c5_88 = arith.constant 5 : index
    %c0_89 = arith.constant 0 : index
    %c0_90 = arith.constant 0 : index
    %124 = vector.load %arg3[%c5_88, %c0_89, %c0_90] : memref<9x8x8xbf16, #tpu.memory_space<vmem>>, vector<1x8x8xbf16>
    %125 = vector.shape_cast %124 : vector<1x8x8xbf16> to vector<8x8xbf16>
    %cst_91 = arith.constant dense<0.000000e+00> : vector<80x8xf32>
    %126 = tpu.matmul %123, %125, %cst_91 {dimension_numbers = #tpu.dot_dimension_numbers<[1], [0], [0], [1], [0, 0, 1, 1], [], []>} : vector<80x8xbf16>, vector<8x8xbf16>, vector<80x8xf32> -> vector<80x8xf32>
    %127 = arith.addf %121, %126 : vector<80x8xf32>
    %c25 = arith.constant 25 : index
    %c0_92 = arith.constant 0 : index
    %128 = vector.load %arg9[%c25, %c0_92] : memref<115x8xf32, #tpu.memory_space<vmem>>, vector<80x8xf32>
    %129 = arith.truncf %128 : vector<80x8xf32> to vector<80x8xbf16>
    %c6_93 = arith.constant 6 : index
    %c0_94 = arith.constant 0 : index
    %c0_95 = arith.constant 0 : index
    %130 = vector.load %arg3[%c6_93, %c0_94, %c0_95] : memref<9x8x8xbf16, #tpu.memory_space<vmem>>, vector<1x8x8xbf16>
    %131 = vector.shape_cast %130 : vector<1x8x8xbf16> to vector<8x8xbf16>
    %cst_96 = arith.constant dense<0.000000e+00> : vector<80x8xf32>
    %132 = tpu.matmul %129, %131, %cst_96 {dimension_numbers = #tpu.dot_dimension_numbers<[1], [0], [0], [1], [0, 0, 1, 1], [], []>} : vector<80x8xbf16>, vector<8x8xbf16>, vector<80x8xf32> -> vector<80x8xf32>
    %133 = arith.addf %127, %132 : vector<80x8xf32>
    %c26 = arith.constant 26 : index
    %c0_97 = arith.constant 0 : index
    %134 = vector.load %arg9[%c26, %c0_97] : memref<115x8xf32, #tpu.memory_space<vmem>>, vector<80x8xf32>
    %135 = arith.truncf %134 : vector<80x8xf32> to vector<80x8xbf16>
    %c7_98 = arith.constant 7 : index
    %c0_99 = arith.constant 0 : index
    %c0_100 = arith.constant 0 : index
    %136 = vector.load %arg3[%c7_98, %c0_99, %c0_100] : memref<9x8x8xbf16, #tpu.memory_space<vmem>>, vector<1x8x8xbf16>
    %137 = vector.shape_cast %136 : vector<1x8x8xbf16> to vector<8x8xbf16>
    %cst_101 = arith.constant dense<0.000000e+00> : vector<80x8xf32>
    %138 = tpu.matmul %135, %137, %cst_101 {dimension_numbers = #tpu.dot_dimension_numbers<[1], [0], [0], [1], [0, 0, 1, 1], [], []>} : vector<80x8xbf16>, vector<8x8xbf16>, vector<80x8xf32> -> vector<80x8xf32>
    %139 = arith.addf %133, %138 : vector<80x8xf32>
    %c27 = arith.constant 27 : index
    %c0_102 = arith.constant 0 : index
    %140 = vector.load %arg9[%c27, %c0_102] : memref<115x8xf32, #tpu.memory_space<vmem>>, vector<80x8xf32>
    %141 = arith.truncf %140 : vector<80x8xf32> to vector<80x8xbf16>
    %c8_103 = arith.constant 8 : index
    %c0_104 = arith.constant 0 : index
    %c0_105 = arith.constant 0 : index
    %142 = vector.load %arg3[%c8_103, %c0_104, %c0_105] : memref<9x8x8xbf16, #tpu.memory_space<vmem>>, vector<1x8x8xbf16>
    %143 = vector.shape_cast %142 : vector<1x8x8xbf16> to vector<8x8xbf16>
    %cst_106 = arith.constant dense<0.000000e+00> : vector<80x8xf32>
    %144 = tpu.matmul %141, %143, %cst_106 {dimension_numbers = #tpu.dot_dimension_numbers<[1], [0], [0], [1], [0, 0, 1, 1], [], []>} : vector<80x8xbf16>, vector<8x8xbf16>, vector<80x8xf32> -> vector<80x8xf32>
    %145 = arith.addf %139, %144 : vector<80x8xf32>
    %c0_107 = arith.constant 0 : index
    %c0_108 = arith.constant 0 : index
    %146 = vector.load %arg6[%c0_107, %c0_108] : memref<1x8xf32, #tpu.memory_space<vmem>>, vector<1x8xf32>
    %147 = vector.broadcast %146 : vector<1x8xf32> to vector<80x8xf32>
    %148 = arith.addf %145, %147 : vector<80x8xf32>
    %cst_109 = arith.constant 0.000000e+00 : f32
    %149 = vector.broadcast %cst_109 : f32 to vector<80x8xf32>
    %150 = arith.maximumf %148, %149 : vector<80x8xf32>
    %c0_110 = arith.constant 0 : index
    %c0_111 = arith.constant 0 : index
    %c0_112 = arith.constant 0 : index
    %151 = vector.load %arg7[%c0_110, %c0_111, %c0_112] : memref<1x80x8xf32, #tpu.memory_space<vmem>>, vector<1x80x8xf32>
    %152 = vector.shape_cast %151 : vector<1x80x8xf32> to vector<80x8xf32>
    %153 = vector.shape_cast %150 : vector<80x8xf32> to vector<1x80x8xf32>
    tpu.vector_store %arg7[%c0_110, %c0_111, %c0_112], %153 {strides = array<i32>} : memref<1x80x8xf32, #tpu.memory_space<vmem>>, vector<1x80x8xf32>,
    return
  }
  func.func @transform_0(%arg0: i32) -> (i32, i32, i32) {
    %c0_i32 = arith.constant 0 : i32
    %c0_i32_0 = arith.constant 0 : i32
    %c0_i32_1 = arith.constant 0 : i32
    return %arg0, %c0_i32, %c0_i32_0 : i32, i32, i32
  }
  func.func @transform_1(%arg0: i32) -> (i32, i32, i32) {
    %c0_i32 = arith.constant 0 : i32
    %c0_i32_0 = arith.constant 0 : i32
    %c0_i32_1 = arith.constant 0 : i32
    %c0_i32_2 = arith.constant 0 : i32
    return %c0_i32, %c0_i32_0, %c0_i32_1 : i32, i32, i32
  }
  func.func @transform_2(%arg0: i32) -> (i32, i32, i32) {
    %c0_i32 = arith.constant 0 : i32
    %c0_i32_0 = arith.constant 0 : i32
    %c0_i32_1 = arith.constant 0 : i32
    %c0_i32_2 = arith.constant 0 : i32
    return %c0_i32, %c0_i32_0, %c0_i32_1 : i32, i32, i32
  }
  func.func @transform_3(%arg0: i32) -> (i32, i32) {
    %c0_i32 = arith.constant 0 : i32
    %c0_i32_0 = arith.constant 0 : i32
    %c0_i32_1 = arith.constant 0 : i32
    return %c0_i32, %c0_i32_0 : i32, i32
  }
  func.func @transform_4(%arg0: i32) -> (i32, i32) {
    %c0_i32 = arith.constant 0 : i32
    %c0_i32_0 = arith.constant 0 : i32
    %c0_i32_1 = arith.constant 0 : i32
    return %c0_i32, %c0_i32_0 : i32, i32
  }
  func.func @transform_5(%arg0: i32) -> (i32, i32) {
    %c0_i32 = arith.constant 0 : i32
    %c0_i32_0 = arith.constant 0 : i32
    %c0_i32_1 = arith.constant 0 : i32
    return %c0_i32, %c0_i32_0 : i32, i32
  }
  func.func @transform_6(%arg0: i32) -> (i32, i32, i32) {
    %c0_i32 = arith.constant 0 : i32
    %c0_i32_0 = arith.constant 0 : i32
    %c0_i32_1 = arith.constant 0 : i32
    return %arg0, %c0_i32, %c0_i32_0 : i32, i32, i32
  }
}

</mosaic_0001>

<llo_original>
// kernel: res_block_p.1
$region0: #{res_block_p.1}
  #allocation0 [shape = 'u32[]', space=smem, size = 0x4, offset = 0x4, fixed_abs, tag = 'smem constant byte address 0x4 - core index']
  #allocation1 [shape = 'u32[72,128]{1,0:T(1,128)}', space=vmem, size = 0x9000, scoped, tag = 'internal scratch']
  #allocation2 [shape = 'f32[400,4]{1,0:T(8,128)}', space=vmem, size = 0x32000, scoped, tag = 'scratch operand']
  #allocation3 [shape = 'f32[115,8]{1,0:T(8,128)}', space=vmem, size = 0xf000, scoped, tag = 'scratch operand']
  %s0 = inlined_call_operand.vmem [shape: bf16[2,400,4], index: 0, kind: input, shape index: {}]
  %s1 = inlined_call_operand.vmem [shape: bf16[9,4,8], index: 1, kind: input, shape index: {}]
  %s2 = inlined_call_operand.vmem [shape: bf16[9,8,8], index: 2, kind: input, shape index: {}]
  %s3 = inlined_call_operand.vmem [shape: bf16[4,8], index: 3, kind: input, shape index: {}]
  %s4 = inlined_call_operand.vmem [shape: f32[1,8], index: 4, kind: input, shape index: {}]
  %s5 = inlined_call_operand.vmem [shape: f32[1,8], index: 5, kind: input, shape index: {}]
  %s6 = inlined_call_operand.vmem [shape: f32[2,80,8], index: 6, kind: output, shape index: {}]
  %s7 = sld [smem:[#allocation0]]
  $region57: #{res_block_p.1} parent=0
    _
  %s9 = ssub.s32 1, %s7
  %s10 = scalar_select 0, %s9, %s7
  loop: start=0, step=1, limit=4
  $region2: #{res_block_p.1} parent=0 // loop_pre_header
    _
  $region3: #{res_block_p.1} parent=0 // loop_header
    %s12 = sphi 0, %s16
    %p13 = scmp.ge.s32.totalorder %s12, 4
    %s22 = sphi 0, %s24
    %s25 = sphi 0, %s22
    %s26 = sphi 0, %s25
    %s42 = sphi 0, %s26
    %s46 = sphi 0, %s46
    %s48 = sphi 0, %s46
    %s49 = sphi 0, %s48
    %s63 = sphi 0, %s49
    %s67 = sphi 0, %s67
    %s69 = sphi 0, %s67
    %s70 = sphi 0, %s69
    %s84 = sphi 0, %s70
    %s88 = sphi 0, %s88
    %s90 = sphi 0, %s88
    %s91 = sphi 0, %s90
    %s105 = sphi 0, %s91
    %s109 = sphi 0, %s109
    %s111 = sphi 0, %s109
    %s112 = sphi 0, %s111
    %s126 = sphi 0, %s112
    %s130 = sphi 0, %s130
    %s132 = sphi 0, %s130
    %s133 = sphi 0, %s132
    %s147 = sphi 0, %s133
    %s153 = sphi 0, %s155
    %s156 = sphi 0, %s153
    %s157 = sphi 0, %s156
    %s173 = sphi 0, %s157
  $region4: #{res_block_p.1} parent=0 // loop_header_branch
    %15 = sbr.rel (%p13) target = $region8
  $region5: #{res_block_p.1} parent=0 // loop_body
    %s17 = ssub.s32 %s12, 1
    %s18 = ssub.s32 %s12, 2
    %s19 = sadd.s32 %s12, 1
    %s20 = ssub.s32 %s12, %s19
    %p21 = scmp.eq.s32.totalorder %s20, 0
    %s23 = sadd.s32 %s22, 1
    %s24 = scalar_select %p21, %s22, %s23
    %p27 = pneg %p21
    %p28 = scmp.eq.s32.totalorder %s12, 1
    %p29 = por %p27, %p28
    %p30 = scmp.ne.s32.totalorder %s22, %s25
    %p31 = scmp.eq.s32.totalorder %s12, 0
    %p32 = por %p30, %p31
    %p33 = scmp.ne.s32.totalorder %s22, %s25
    %p34 = scmp.eq.s32.totalorder %s17, 1
    %p35 = por %p33, %p34
    %p36 = scmp.ne.s32.totalorder %s25, %s26
    %p37 = scmp.eq.s32.totalorder %s17, 0
    %p38 = por %p36, %p37
    %p39 = scmp.ne.s32.totalorder %s25, %s26
    %p40 = scmp.eq.s32.totalorder %s18, 1
    %p41 = por %p39, %p40
    %p43 = scmp.ne.s32.totalorder %s26, %s42
    %p44 = scmp.eq.s32.totalorder %s18, 0
    %p45 = por %p43, %p44
    %s47 = sadd.s32 %s46, 1
    %p50 = scmp.eq.s32.totalorder %s12, 1
    %p51 = scmp.ne.s32.totalorder %s46, %s48
    %p52 = scmp.eq.s32.totalorder %s12, 0
    %p53 = por %p51, %p52
    %p54 = scmp.ne.s32.totalorder %s46, %s48
    %p55 = scmp.eq.s32.totalorder %s17, 1
    %p56 = por %p54, %p55
    %p57 = scmp.ne.s32.totalorder %s48, %s49
    %p58 = scmp.eq.s32.totalorder %s17, 0
    %p59 = por %p57, %p58
    %p60 = scmp.ne.s32.totalorder %s48, %s49
    %p61 = scmp.eq.s32.totalorder %s18, 1
    %p62 = por %p60, %p61
    %p64 = scmp.ne.s32.totalorder %s49, %s63
    %p65 = scmp.eq.s32.totalorder %s18, 0
    %p66 = por %p64, %p65
    %s68 = sadd.s32 %s67, 1
    %p71 = scmp.eq.s32.totalorder %s12, 1
    %p72 = scmp.ne.s32.totalorder %s67, %s69
    %p73 = scmp.eq.s32.totalorder %s12, 0
    %p74 = por %p72, %p73
    %p75 = scmp.ne.s32.totalorder %s67, %s69
    %p76 = scmp.eq.s32.totalorder %s17, 1
    %p77 = por %p75, %p76
    %p78 = scmp.ne.s32.totalorder %s69, %s70
    %p79 = scmp.eq.s32.totalorder %s17, 0
    %p80 = por %p78, %p79
    %p81 = scmp.ne.s32.totalorder %s69, %s70
    %p82 = scmp.eq.s32.totalorder %s18, 1
    %p83 = por %p81, %p82
    %p85 = scmp.ne.s32.totalorder %s70, %s84
    %p86 = scmp.eq.s32.totalorder %s18, 0
    %p87 = por %p85, %p86
    %s89 = sadd.s32 %s88, 1
    %p92 = scmp.eq.s32.totalorder %s12, 1
    %p93 = scmp.ne.s32.totalorder %s88, %s90
    %p94 = scmp.eq.s32.totalorder %s12, 0
    %p95 = por %p93, %p94
    %p96 = scmp.ne.s32.totalorder %s88, %s90
    %p97 = scmp.eq.s32.totalorder %s17, 1
    %p98 = por %p96, %p97
    %p99 = scmp.ne.s32.totalorder %s90, %s91
    %p100 = scmp.eq.s32.totalorder %s17, 0
    %p101 = por %p99, %p100
    %p102 = scmp.ne.s32.totalorder %s90, %s91
    %p103 = scmp.eq.s32.totalorder %s18, 1
    %p104 = por %p102, %p103
    %p106 = scmp.ne.s32.totalorder %s91, %s105
    %p107 = scmp.eq.s32.totalorder %s18, 0
    %p108 = por %p106, %p107
    %s110 = sadd.s32 %s109, 1
    %p113 = scmp.eq.s32.totalorder %s12, 1
    %p114 = scmp.ne.s32.totalorder %s109, %s111
    %p115 = scmp.eq.s32.totalorder %s12, 0
    %p116 = por %p114, %p115
    %p117 = scmp.ne.s32.totalorder %s109, %s111
    %p118 = scmp.eq.s32.totalorder %s17, 1
    %p119 = por %p117, %p118
    %p120 = scmp.ne.s32.totalorder %s111, %s112
    %p121 = scmp.eq.s32.totalorder %s17, 0
    %p122 = por %p120, %p121
    %p123 = scmp.ne.s32.totalorder %s111, %s112
    %p124 = scmp.eq.s32.totalorder %s18, 1
    %p125 = por %p123, %p124
    %p127 = scmp.ne.s32.totalorder %s112, %s126
    %p128 = scmp.eq.s32.totalorder %s18, 0
    %p129 = por %p127, %p128
    %s131 = sadd.s32 %s130, 1
    %p134 = scmp.eq.s32.totalorder %s12, 1
    %p135 = scmp.ne.s32.totalorder %s130, %s132
    %p136 = scmp.eq.s32.totalorder %s12, 0
    %p137 = por %p135, %p136
    %p138 = scmp.ne.s32.totalorder %s130, %s132
    %p139 = scmp.eq.s32.totalorder %s17, 1
    %p140 = por %p138, %p139
    %p141 = scmp.ne.s32.totalorder %s132, %s133
    %p142 = scmp.eq.s32.totalorder %s17, 0
    %p143 = por %p141, %p142
    %p144 = scmp.ne.s32.totalorder %s132, %s133
    %p145 = scmp.eq.s32.totalorder %s18, 1
    %p146 = por %p144, %p145
    %p148 = scmp.ne.s32.totalorder %s133, %s147
    %p149 = scmp.eq.s32.totalorder %s18, 0
    %p150 = por %p148, %p149
    %s151 = ssub.s32 %s12, %s19
    %p152 = scmp.eq.s32.totalorder %s151, 0
    %s154 = sadd.s32 %s153, 1
    %s155 = scalar_select %p152, %s153, %s154
    %p158 = pneg %p152
    %p159 = scmp.eq.s32.totalorder %s12, 1
    %p160 = por %p158, %p159
    %p161 = scmp.ne.s32.totalorder %s153, %s156
    %p162 = scmp.eq.s32.totalorder %s12, 0
    %p163 = por %p161, %p162
    %p164 = scmp.ne.s32.totalorder %s153, %s156
    %p165 = scmp.eq.s32.totalorder %s17, 1
    %p166 = por %p164, %p165
    %p167 = scmp.ne.s32.totalorder %s156, %s157
    %p168 = scmp.eq.s32.totalorder %s17, 0
    %p169 = por %p167, %p168
    %p170 = scmp.ne.s32.totalorder %s156, %s157
    %p171 = scmp.eq.s32.totalorder %s18, 1
    %p172 = por %p170, %p171
    %p174 = scmp.ne.s32.totalorder %s157, %s173
    %p175 = scmp.eq.s32.totalorder %s18, 0
    %p176 = por %p174, %p175
    %p177 = scmp.le.s32.totalorder 1, %s12
    %p178 = scmp.lt.s32.totalorder %s12, 3
    %p179 = pnand %p177, %p178
    %p180 = pneg %p179
    // Predicated region
    $region9: #{res_block_p.1} parent=5 // pred_check
      _
    $region10: #{res_block_p.1} parent=5 // pred_check_branch
      %182 = sbr.rel (%p179) target = $region12
    $region11: #{res_block_p.1} parent=5 // pred_region
      %s183 = ssub.s32 %s12, 1
      // Predicated region
      $region13: #{res_block_p.1} parent=11 // pred_check
        %p184 = pneg %p59
      $region14: #{res_block_p.1} parent=11 // pred_check_branch
        %186 = sbr.rel (%p184) target = $region16
      $region15: #{res_block_p.1} parent=11 // pred_region
        _
      $region16: #{res_block_p.1} parent=11 // pred_fallthru
        _
      // Predicated region
      $region17: #{res_block_p.1} parent=11 // pred_check
        %p187 = pneg %p80
      $region18: #{res_block_p.1} parent=11 // pred_check_branch
        %189 = sbr.rel (%p187) target = $region20
      $region19: #{res_block_p.1} parent=11 // pred_region
        _
      $region20: #{res_block_p.1} parent=11 // pred_fallthru
        _
      // Predicated region
      $region21: #{res_block_p.1} parent=11 // pred_check
        %p190 = pneg %p101
      $region22: #{res_block_p.1} parent=11 // pred_check_branch
        %192 = sbr.rel (%p190) target = $region24
      $region23: #{res_block_p.1} parent=11 // pred_region
        _
      $region24: #{res_block_p.1} parent=11 // pred_fallthru
        _
      // Predicated region
      $region25: #{res_block_p.1} parent=11 // pred_check
        %p193 = pneg %p122
      $region26: #{res_block_p.1} parent=11 // pred_check_branch
        %195 = sbr.rel (%p193) target = $region28
      $region27: #{res_block_p.1} parent=11 // pred_region
        _
      $region28: #{res_block_p.1} parent=11 // pred_fallthru
        _
      // Predicated region
      $region29: #{res_block_p.1} parent=11 // pred_check
        %p196 = pneg %p143
      $region30: #{res_block_p.1} parent=11 // pred_check_branch
        %198 = sbr.rel (%p196) target = $region32
      $region31: #{res_block_p.1} parent=11 // pred_region
        _
      $region32: #{res_block_p.1} parent=11 // pred_fallthru
        _
    $region12: #{res_block_p.1} parent=5 // pred_fallthru
      _
    %p199 = scmp.lt.s32.totalorder %s12, 2
    // Predicated region
    $region33: #{res_block_p.1} parent=5 // pred_check
      %p200 = pneg %p199
    $region34: #{res_block_p.1} parent=5 // pred_check_branch
      %202 = sbr.rel (%p200) target = $region36
    $region35: #{res_block_p.1} parent=5 // pred_region
      // Predicated region
      $region37: #{res_block_p.1} parent=35 // pred_check
        %p203 = pneg %p32
      $region38: #{res_block_p.1} parent=35 // pred_check_branch
        %205 = sbr.rel (%p203) target = $region40
      $region39: #{res_block_p.1} parent=35 // pred_region
        %p206 = scmp.lt.s32.totalorder %s12, 1
        %s207 = scalar_select %p206, %s12, 1
        %s208 = smul.addr %s207, 50
        %s209 = smul.addr %s208, 4
        %s210 = scalar_lea.vmem %s0, %s209
      $region40: #{res_block_p.1} parent=35 // pred_fallthru
        _
    $region36: #{res_block_p.1} parent=5 // pred_fallthru
      _
    %p211 = scmp.le.s32.totalorder 1, %s12
    %p212 = scmp.lt.s32.totalorder %s12, 3
    %p213 = pnand %p211, %p212
    %p214 = pneg %p213
    // Predicated region
    $region41: #{res_block_p.1} parent=5 // pred_check
      _
    $region42: #{res_block_p.1} parent=5 // pred_check_branch
      %216 = sbr.rel (%p213) target = $region44
    $region43: #{res_block_p.1} parent=5 // pred_region
      %s217 = ssub.s32 %s12, 1
      %p218 = scmp.lt.s32.totalorder %s17, 1
      %s219 = scalar_select %p218, %s17, 1
      %s220 = smul.addr %s219, 50
      %s221 = smul.addr %s220, 4
      %s222 = scalar_lea.vmem %s0, %s221
      %p223 = pneg %p38
      %p224 = pneg %p35
      %p225 = pneg %p59
      %p226 = pneg %p56
      %p227 = pneg %p80
      %p228 = pneg %p77
      %p229 = pneg %p101
      %p230 = pneg %p98
      %p231 = pneg %p122
      %p232 = pneg %p119
      %p233 = pneg %p143
      %p234 = pneg %p140
      %p235 = pneg %p169
      %p236 = pneg %p166
      %p237 = scmp.lt.s32.totalorder %s17, 1
      %s238 = scalar_select %p237, %s17, 1
      %s239 = smul.addr %s238, 10
      %s240 = smul.addr %s239, 8
      %s241 = scalar_lea.vmem %s6, %s240
      %p242 = scmp.lt.s32.totalorder %s17, 1
      %s243 = scalar_select %p242, %s17, 1
      %s244 = smul.addr %s243, 50
      %s245 = smul.addr %s244, 4
      %s246 = scalar_lea.vmem %s0, %s245
      %p247 = scmp.lt.s32.totalorder %s17, 1
      %s248 = scalar_select %p247, %s17, 1
      %s249 = smul.addr %s248, 10
      %s250 = smul.addr %s249, 8
      %s251 = scalar_lea.vmem %s6, %s250
      %v253 = vld [vmem:[%s246] sm:$0xf]
      %v254 = vld [vmem:[%s246 + $0x4] sm:$0xf]
      %v255 = vld [vmem:[%s246 + $0x8] sm:$0xf]
      %v256 = vld [vmem:[%s246 + $0xc] sm:$0xf]
      %v257 = vld [vmem:[%s246 + $0x10] sm:$0xf]
      %v258 = vld [vmem:[%s246 + $0x14] sm:$0xf]
      %v259 = vld [vmem:[%s246 + $0x18] sm:$0xf]
      %v260 = vld [vmem:[%s246 + $0x1c] sm:$0xf]
      %v261 = vld [vmem:[%s246 + $0x20] sm:$0xf]
      %v262 = vld [vmem:[%s246 + $0x24] sm:$0xf]
      %v263 = vld [vmem:[%s246 + $0x28] sm:$0xf]
      %v264 = vld [vmem:[%s246 + $0x2c] sm:$0xf]
      %v265 = vld [vmem:[%s246 + $0x30] sm:$0xf]
      %v266 = vld [vmem:[%s246 + $0x34] sm:$0xf]
      %v267 = vld [vmem:[%s246 + $0x38] sm:$0xf]
      %v268 = vld [vmem:[%s246 + $0x3c] sm:$0xf]
      %v269 = vld [vmem:[%s246 + $0x40] sm:$0xf]
      %v270 = vld [vmem:[%s246 + $0x44] sm:$0xf]
      %v271 = vld [vmem:[%s246 + $0x48] sm:$0xf]
      %v272 = vld [vmem:[%s246 + $0x4c] sm:$0xf]
      %v273 = vld [vmem:[%s246 + $0x50] sm:$0xf]
      %v274 = vld [vmem:[%s246 + $0x54] sm:$0xf]
      %v275 = vld [vmem:[%s246 + $0x58] sm:$0xf]
      %v276 = vld [vmem:[%s246 + $0x5c] sm:$0xf]
      %v277 = vld [vmem:[%s246 + $0x60] sm:$0xf]
      %v278 = vld [vmem:[%s246 + $0x64] sm:$0xf]
      %v279 = vld [vmem:[%s246 + $0x68] sm:$0xf]
      %v280 = vld [vmem:[%s246 + $0x6c] sm:$0xf]
      %v281 = vld [vmem:[%s246 + $0x70] sm:$0xf]
      %v282 = vld [vmem:[%s246 + $0x74] sm:$0xf]
      %v283 = vld [vmem:[%s246 + $0x78] sm:$0xf]
      %v284 = vld [vmem:[%s246 + $0x7c] sm:$0xf]
      %v285 = vld [vmem:[%s246 + $0x80] sm:$0xf]
      %v286 = vld [vmem:[%s246 + $0x84] sm:$0xf]
      %v287 = vld [vmem:[%s246 + $0x88] sm:$0xf]
      %v288 = vld [vmem:[%s246 + $0x8c] sm:$0xf]
      %v289 = vld [vmem:[%s246 + $0x90] sm:$0xf]
      %v290 = vld [vmem:[%s246 + $0x94] sm:$0xf]
      %v291 = vld [vmem:[%s246 + $0x98] sm:$0xf]
      %v292 = vld [vmem:[%s246 + $0x9c] sm:$0xf]
      %v293 = vld [vmem:[%s246 + $0xa0] sm:$0xf]
      %v294 = vld [vmem:[%s246 + $0xa4] sm:$0xf]
      %v295 = vld [vmem:[%s246 + $0xa8] sm:$0xf]
      %v296 = vld [vmem:[%s246 + $0xac] sm:$0xf]
      %v297 = vld [vmem:[%s246 + $0xb0] sm:$0xf]
      %v298 = vld [vmem:[%s246 + $0xb4] sm:$0xf]
      %v299 = vld [vmem:[%s246 + $0xb8] sm:$0xf]
      %v300 = vld [vmem:[%s246 + $0xbc] sm:$0xf]
      %v301 = vld [vmem:[%s246 + $0xc0] sm:$0xf]
      %v302 = vld [vmem:[%s246 + $0xc4] sm:$0xf]
      %v303 = vunpack.c.l.bf16 %v253
      %v304 = vunpack.c.l.bf16 %v254
      %v305 = vunpack.c.l.bf16 %v255
      %v306 = vunpack.c.l.bf16 %v256
      %v307 = vunpack.c.l.bf16 %v257
      %v308 = vunpack.c.l.bf16 %v258
      %v309 = vunpack.c.l.bf16 %v259
      %v310 = vunpack.c.l.bf16 %v260
      %v311 = vunpack.c.l.bf16 %v261
      %v312 = vunpack.c.l.bf16 %v262
      %v313 = vunpack.c.l.bf16 %v263
      %v314 = vunpack.c.l.bf16 %v264
      %v315 = vunpack.c.l.bf16 %v265
      %v316 = vunpack.c.l.bf16 %v266
      %v317 = vunpack.c.l.bf16 %v267
      %v318 = vunpack.c.l.bf16 %v268
      %v319 = vunpack.c.l.bf16 %v269
      %v320 = vunpack.c.l.bf16 %v270
      %v321 = vunpack.c.l.bf16 %v271
      %v322 = vunpack.c.l.bf16 %v272
      %v323 = vunpack.c.l.bf16 %v273
      %v324 = vunpack.c.l.bf16 %v274
      %v325 = vunpack.c.l.bf16 %v275
      %v326 = vunpack.c.l.bf16 %v276
      %v327 = vunpack.c.l.bf16 %v277
      %v328 = vunpack.c.l.bf16 %v278
      %v329 = vunpack.c.l.bf16 %v279
      %v330 = vunpack.c.l.bf16 %v280
      %v331 = vunpack.c.l.bf16 %v281
      %v332 = vunpack.c.l.bf16 %v282
      %v333 = vunpack.c.l.bf16 %v283
      %v334 = vunpack.c.l.bf16 %v284
      %v335 = vunpack.c.l.bf16 %v285
      %v336 = vunpack.c.l.bf16 %v286
      %v337 = vunpack.c.l.bf16 %v287
      %v338 = vunpack.c.l.bf16 %v288
      %v339 = vunpack.c.l.bf16 %v289
      %v340 = vunpack.c.l.bf16 %v290
      %v341 = vunpack.c.l.bf16 %v291
      %v342 = vunpack.c.l.bf16 %v292
      %v343 = vunpack.c.l.bf16 %v293
      %v344 = vunpack.c.l.bf16 %v294
      %v345 = vunpack.c.l.bf16 %v295
      %v346 = vunpack.c.l.bf16 %v296
      %v347 = vunpack.c.l.bf16 %v297
      %v348 = vunpack.c.l.bf16 %v298
      %v349 = vunpack.c.l.bf16 %v299
      %v350 = vunpack.c.l.bf16 %v300
      %v351 = vunpack.c.l.bf16 %v301
      %v352 = vunpack.c.l.bf16 %v302
      %vm353 = vcmask 31744
      %354 = vst.msk [vmem:[#allocation2] sm:$0xff] %vm353, %v303
      %355 = vst.msk [vmem:[#allocation2 + $0x8] sm:$0xff] %vm353, %v304
      %356 = vst.msk [vmem:[#allocation2 + $0x10] sm:$0xff] %vm353, %v305
      %357 = vst.msk [vmem:[#allocation2 + $0x18] sm:$0xff] %vm353, %v306
      %358 = vst.msk [vmem:[#allocation2 + $0x20] sm:$0xff] %vm353, %v307
      %359 = vst.msk [vmem:[#allocation2 + $0x28] sm:$0xff] %vm353, %v308
      %360 = vst.msk [vmem:[#allocation2 + $0x30] sm:$0xff] %vm353, %v309
      %361 = vst.msk [vmem:[#allocation2 + $0x38] sm:$0xff] %vm353, %v310
      %362 = vst.msk [vmem:[#allocation2 + $0x40] sm:$0xff] %vm353, %v311
      %363 = vst.msk [vmem:[#allocation2 + $0x48] sm:$0xff] %vm353, %v312
      %364 = vst.msk [vmem:[#allocation2 + $0x50] sm:$0xff] %vm353, %v313
      %365 = vst.msk [vmem:[#allocation2 + $0x58] sm:$0xff] %vm353, %v314
      %366 = vst.msk [vmem:[#allocation2 + $0x60] sm:$0xff] %vm353, %v315
      %367 = vst.msk [vmem:[#allocation2 + $0x68] sm:$0xff] %vm353, %v316
      %368 = vst.msk [vmem:[#allocation2 + $0x70] sm:$0xff] %vm353, %v317
      %369 = vst.msk [vmem:[#allocation2 + $0x78] sm:$0xff] %vm353, %v318
      %370 = vst.msk [vmem:[#allocation2 + $0x80] sm:$0xff] %vm353, %v319
      %371 = vst.msk [vmem:[#allocation2 + $0x88] sm:$0xff] %vm353, %v320
      %372 = vst.msk [vmem:[#allocation2 + $0x90] sm:$0xff] %vm353, %v321
      %373 = vst.msk [vmem:[#allocation2 + $0x98] sm:$0xff] %vm353, %v322
      %374 = vst.msk [vmem:[#allocation2 + $0xa0] sm:$0xff] %vm353, %v323
      %375 = vst.msk [vmem:[#allocation2 + $0xa8] sm:$0xff] %vm353, %v324
      %376 = vst.msk [vmem:[#allocation2 + $0xb0] sm:$0xff] %vm353, %v325
      %377 = vst.msk [vmem:[#allocation2 + $0xb8] sm:$0xff] %vm353, %v326
      %378 = vst.msk [vmem:[#allocation2 + $0xc0] sm:$0xff] %vm353, %v327
      %379 = vst.msk [vmem:[#allocation2 + $0xc8] sm:$0xff] %vm353, %v328
      %380 = vst.msk [vmem:[#allocation2 + $0xd0] sm:$0xff] %vm353, %v329
      %381 = vst.msk [vmem:[#allocation2 + $0xd8] sm:$0xff] %vm353, %v330
      %382 = vst.msk [vmem:[#allocation2 + $0xe0] sm:$0xff] %vm353, %v331
      %383 = vst.msk [vmem:[#allocation2 + $0xe8] sm:$0xff] %vm353, %v332
      %384 = vst.msk [vmem:[#allocation2 + $0xf0] sm:$0xff] %vm353, %v333
      %385 = vst.msk [vmem:[#allocation2 + $0xf8] sm:$0xff] %vm353, %v334
      %386 = vst.msk [vmem:[#allocation2 + $0x100] sm:$0xff] %vm353, %v335
      %387 = vst.msk [vmem:[#allocation2 + $0x108] sm:$0xff] %vm353, %v336
      %388 = vst.msk [vmem:[#allocation2 + $0x110] sm:$0xff] %vm353, %v337
      %389 = vst.msk [vmem:[#allocation2 + $0x118] sm:$0xff] %vm353, %v338
      %390 = vst.msk [vmem:[#allocation2 + $0x120] sm:$0xff] %vm353, %v339
      %391 = vst.msk [vmem:[#allocation2 + $0x128] sm:$0xff] %vm353, %v340
      %392 = vst.msk [vmem:[#allocation2 + $0x130] sm:$0xff] %vm353, %v341
      %393 = vst.msk [vmem:[#allocation2 + $0x138] sm:$0xff] %vm353, %v342
      %394 = vst.msk [vmem:[#allocation2 + $0x140] sm:$0xff] %vm353, %v343
      %395 = vst.msk [vmem:[#allocation2 + $0x148] sm:$0xff] %vm353, %v344
      %396 = vst.msk [vmem:[#allocation2 + $0x150] sm:$0xff] %vm353, %v345
      %397 = vst.msk [vmem:[#allocation2 + $0x158] sm:$0xff] %vm353, %v346
      %398 = vst.msk [vmem:[#allocation2 + $0x160] sm:$0xff] %vm353, %v347
      %399 = vst.msk [vmem:[#allocation2 + $0x168] sm:$0xff] %vm353, %v348
      %400 = vst.msk [vmem:[#allocation2 + $0x170] sm:$0xff] %vm353, %v349
      %401 = vst.msk [vmem:[#allocation2 + $0x178] sm:$0xff] %vm353, %v350
      %402 = vst.msk [vmem:[#allocation2 + $0x180] sm:$0xff] %vm353, %v351
      %403 = vst.msk [vmem:[#allocation2 + $0x188] sm:$0xff] %vm353, %v352
      %v404 = vld [vmem:[#allocation2] sm:$0xff]
      %v405 = vld [vmem:[#allocation2 + $0x8] sm:$0xff]
      %v406 = vld [vmem:[#allocation2 + $0x10] sm:$0xff]
      %v407 = vld [vmem:[#allocation2 + $0x18] sm:$0xff]
      %v408 = vld [vmem:[#allocation2 + $0x20] sm:$0xff]
      %v409 = vld [vmem:[#allocation2 + $0x28] sm:$0xff]
      %v410 = vld [vmem:[#allocation2 + $0x30] sm:$0xff]
      %v411 = vld [vmem:[#allocation2 + $0x38] sm:$0xff]
      %v412 = vld [vmem:[#allocation2 + $0x40] sm:$0xff]
      %v413 = vld [vmem:[#allocation2 + $0x48] sm:$0xff]
      %v414 = vpack.c.bf16 %v405, %v404
      %v415 = vpack.c.bf16 %v407, %v406
      %v416 = vpack.c.bf16 %v409, %v408
      %v417 = vpack.c.bf16 %v411, %v410
      %v418 = vpack.c.bf16 %v413, %v412
      %v419 = vld [vmem:[%s1] sm:$0x3]
      %v420 = vld [vmem:[#allocation2 + $0x64] sm:$0xff]
      %v421 = vld [vmem:[#allocation2 + $0x6c] sm:$0xff]
      %v422 = vld [vmem:[#allocation2 + $0x74] sm:$0xff]
      %v423 = vld [vmem:[#allocation2 + $0x7c] sm:$0xff]
      %v424 = vld [vmem:[#allocation2 + $0x84] sm:$0xff]
      %v425 = vld [vmem:[#allocation2 + $0x8c] sm:$0xff]
      %v426 = vld [vmem:[#allocation2 + $0x94] sm:$0xff]
      %v427 = vld [vmem:[#allocation2 + $0x9c] sm:$0xff]
      %v428 = vld [vmem:[#allocation2 + $0xa4] sm:$0xff]
      %v429 = vld [vmem:[#allocation2 + $0xac] sm:$0xff]
      %v430 = vpack.c.bf16 %v421, %v420
      %v431 = vpack.c.bf16 %v423, %v422
      %v432 = vpack.c.bf16 %v425, %v424
      %v433 = vpack.c.bf16 %v427, %v426
      %v434 = vpack.c.bf16 %v429, %v428
      %s435 = scalar_lea.vmem %s1, 2
      %v436 = vld [vmem:[%s435] sm:$0x3]
      %v438 = vsel %vm353, %v430, 0
      %v441 = vsel %vm353, %v431, 0
      %v444 = vsel %vm353, %v432, 0
      %v447 = vsel %vm353, %v433, 0
      %v450 = vsel %vm353, %v434, 0
      %vm452 = vcmask 1041408
      %v454 = vsel %vm452, %v436, 0
      %456 = vmatpush.bf16.msra.mxu0 0
      %457 = vmatpush.bf16.msra.mxu0 0
      %458 = vmatpush.bf16.msra.mxu0 0
      %459 = vmatpush.bf16.msra.mxu0 0
      %460 = vmatpush.bf16.msra.mxu0 0
      %461 = vmatpush.bf16.msra.mxu0 0
      %462 = vmatpush.bf16.msra.mxu0 0
      %463 = vmatpush.bf16.msra.mxu0 %v454
      %464 = vmatmul.bf16.gmra.mxu0 %v438
      %v465 = vpop.f32.mrf.mxu0
      %v466 = vadd.f32 0.0, %v465
      %v467 = vpop.f32.mrf.mxu0
      %v468 = vadd.f32 0.0, %v467
      %469 = vmatmul.bf16.gmra.mxu0 %v441
      %v470 = vpop.f32.mrf.mxu0
      %v471 = vadd.f32 0.0, %v470
      %v472 = vpop.f32.mrf.mxu0
      %v473 = vadd.f32 0.0, %v472
      %474 = vmatmul.bf16.gmra.mxu0 %v444
      %v475 = vpop.f32.mrf.mxu0
      %v476 = vadd.f32 0.0, %v475
      %v477 = vpop.f32.mrf.mxu0
      %v478 = vadd.f32 0.0, %v477
      %479 = vmatmul.bf16.gmra.mxu0 %v447
      %v480 = vpop.f32.mrf.mxu0
      %v481 = vadd.f32 0.0, %v480
      %v482 = vpop.f32.mrf.mxu0
      %v483 = vadd.f32 0.0, %v482
      %484 = vmatmul.bf16.gmra.mxu0 %v450
      %v485 = vpop.f32.mrf.mxu0
      %v486 = vadd.f32 0.0, %v485
      %v487 = vpop.f32.mrf.mxu0
      %v488 = vadd.f32 0.0, %v487
      %489 = vdwg.mxu0
      %v491 = vsel %vm353, %v414, 0
      %v494 = vsel %vm353, %v415, 0
      %v497 = vsel %vm353, %v416, 0
      %v500 = vsel %vm353, %v417, 0
      %v503 = vsel %vm353, %v418, 0
      %v506 = vsel %vm452, %v419, 0
      %508 = vmatpush.bf16.msra.mxu0 0
      %509 = vmatpush.bf16.msra.mxu0 0
      %510 = vmatpush.bf16.msra.mxu0 0
      %511 = vmatpush.bf16.msra.mxu0 0
      %512 = vmatpush.bf16.msra.mxu0 0
      %513 = vmatpush.bf16.msra.mxu0 0
      %514 = vmatpush.bf16.msra.mxu0 0
      %515 = vmatpush.bf16.msra.mxu0 %v506
      %516 = vmatmul.bf16.gmra.mxu0 %v491
      %v517 = vpop.f32.mrf.mxu0
      %v518 = vadd.f32 %v466, %v517
      %v519 = vpop.f32.mrf.mxu0
      %v520 = vadd.f32 %v468, %v519
      %521 = vmatmul.bf16.gmra.mxu0 %v494
      %v522 = vpop.f32.mrf.mxu0
      %v523 = vadd.f32 %v471, %v522
      %v524 = vpop.f32.mrf.mxu0
      %v525 = vadd.f32 %v473, %v524
      %526 = vmatmul.bf16.gmra.mxu0 %v497
      %v527 = vpop.f32.mrf.mxu0
      %v528 = vadd.f32 %v476, %v527
      %v529 = vpop.f32.mrf.mxu0
      %v530 = vadd.f32 %v478, %v529
      %531 = vmatmul.bf16.gmra.mxu0 %v500
      %v532 = vpop.f32.mrf.mxu0
      %v533 = vadd.f32 %v481, %v532
      %v534 = vpop.f32.mrf.mxu0
      %v535 = vadd.f32 %v483, %v534
      %536 = vmatmul.bf16.gmra.mxu0 %v503
      %v537 = vpop.f32.mrf.mxu0
      %v538 = vadd.f32 %v486, %v537
      %v539 = vpop.f32.mrf.mxu0
      %v540 = vadd.f32 %v488, %v539
      %541 = vdwg.mxu0
      %v542 = vld [vmem:[#allocation2 + $0x1] sm:$0xff]
      %v543 = vld [vmem:[#allocation2 + $0x9] sm:$0xff]
      %v544 = vld [vmem:[#allocation2 + $0x11] sm:$0xff]
      %v545 = vld [vmem:[#allocation2 + $0x19] sm:$0xff]
      %v546 = vld [vmem:[#allocation2 + $0x21] sm:$0xff]
      %v547 = vld [vmem:[#allocation2 + $0x29] sm:$0xff]
      %v548 = vld [vmem:[#allocation2 + $0x31] sm:$0xff]
      %v549 = vld [vmem:[#allocation2 + $0x39] sm:$0xff]
      %v550 = vld [vmem:[#allocation2 + $0x41] sm:$0xff]
      %v551 = vld [vmem:[#allocation2 + $0x49] sm:$0xff]
      %v552 = vpack.c.bf16 %v543, %v542
      %v553 = vpack.c.bf16 %v545, %v544
      %v554 = vpack.c.bf16 %v547, %v546
      %v555 = vpack.c.bf16 %v549, %v548
      %v556 = vpack.c.bf16 %v551, %v550
      %s557 = scalar_lea.vmem %s1, 4
      %v558 = vld [vmem:[%s557] sm:$0x3]
      %v560 = vsel %vm353, %v552, 0
      %v563 = vsel %vm353, %v553, 0
      %v566 = vsel %vm353, %v554, 0
      %v569 = vsel %vm353, %v555, 0
      %v572 = vsel %vm353, %v556, 0
      %v575 = vsel %vm452, %v558, 0
      %577 = vmatpush.bf16.msra.mxu0 0
      %578 = vmatpush.bf16.msra.mxu0 0
      %579 = vmatpush.bf16.msra.mxu0 0
      %580 = vmatpush.bf16.msra.mxu0 0
      %581 = vmatpush.bf16.msra.mxu0 0
      %582 = vmatpush.bf16.msra.mxu0 0
      %583 = vmatpush.bf16.msra.mxu0 0
      %584 = vmatpush.bf16.msra.mxu0 %v575
      %585 = vmatmul.bf16.gmra.mxu0 %v560
      %v586 = vpop.f32.mrf.mxu0
      %v587 = vadd.f32 0.0, %v586
      %v588 = vpop.f32.mrf.mxu0
      %v589 = vadd.f32 0.0, %v588
      %590 = vmatmul.bf16.gmra.mxu0 %v563
      %v591 = vpop.f32.mrf.mxu0
      %v592 = vadd.f32 0.0, %v591
      %v593 = vpop.f32.mrf.mxu0
      %v594 = vadd.f32 0.0, %v593
      %595 = vmatmul.bf16.gmra.mxu0 %v566
      %v596 = vpop.f32.mrf.mxu0
      %v597 = vadd.f32 0.0, %v596
      %v598 = vpop.f32.mrf.mxu0
      %v599 = vadd.f32 0.0, %v598
      %600 = vmatmul.bf16.gmra.mxu0 %v569
      %v601 = vpop.f32.mrf.mxu0
      %v602 = vadd.f32 0.0, %v601
      %v603 = vpop.f32.mrf.mxu0
      %v604 = vadd.f32 0.0, %v603
      %605 = vmatmul.bf16.gmra.mxu0 %v572
      %v606 = vpop.f32.mrf.mxu0
      %v607 = vadd.f32 0.0, %v606
      %v608 = vpop.f32.mrf.mxu0
      %v609 = vadd.f32 0.0, %v608
      %610 = vdwg.mxu0
      %v611 = vadd.f32 %v518, %v587
      %v612 = vadd.f32 %v520, %v589
      %v613 = vadd.f32 %v523, %v592
      %v614 = vadd.f32 %v525, %v594
      %v615 = vadd.f32 %v528, %v597
      %v616 = vadd.f32 %v530, %v599
      %v617 = vadd.f32 %v533, %v602
      %v618 = vadd.f32 %v535, %v604
      %v619 = vadd.f32 %v538, %v607
      %v620 = vadd.f32 %v540, %v609
      %v621 = vld [vmem:[#allocation2 + $0xc8] sm:$0xff]
      %v622 = vld [vmem:[#allocation2 + $0xd0] sm:$0xff]
      %v623 = vld [vmem:[#allocation2 + $0xd8] sm:$0xff]
      %v624 = vld [vmem:[#allocation2 + $0xe0] sm:$0xff]
      %v625 = vld [vmem:[#allocation2 + $0xe8] sm:$0xff]
      %v626 = vld [vmem:[#allocation2 + $0xf0] sm:$0xff]
      %v627 = vld [vmem:[#allocation2 + $0xf8] sm:$0xff]
      %v628 = vld [vmem:[#allocation2 + $0x100] sm:$0xff]
      %v629 = vld [vmem:[#allocation2 + $0x108] sm:$0xff]
      %v630 = vld [vmem:[#allocation2 + $0x110] sm:$0xff]
      %v631 = vpack.c.bf16 %v622, %v621
      %v632 = vpack.c.bf16 %v624, %v623
      %v633 = vpack.c.bf16 %v626, %v625
      %v634 = vpack.c.bf16 %v628, %v627
      %v635 = vpack.c.bf16 %v630, %v629
      %s636 = scalar_lea.vmem %s1, 6
      %v637 = vld [vmem:[%s636] sm:$0x3]
      %v639 = vsel %vm353, %v631, 0
      %v642 = vsel %vm353, %v632, 0
      %v645 = vsel %vm353, %v633, 0
      %v648 = vsel %vm353, %v634, 0
      %v651 = vsel %vm353, %v635, 0
      %v654 = vsel %vm452, %v637, 0
      %656 = vmatpush.bf16.msra.mxu0 0
      %657 = vmatpush.bf16.msra.mxu0 0
      %658 = vmatpush.bf16.msra.mxu0 0
      %659 = vmatpush.bf16.msra.mxu0 0
      %660 = vmatpush.bf16.msra.mxu0 0
      %661 = vmatpush.bf16.msra.mxu0 0
      %662 = vmatpush.bf16.msra.mxu0 0
      %663 = vmatpush.bf16.msra.mxu0 %v654
      %664 = vmatmul.bf16.gmra.mxu0 %v639
      %v665 = vpop.f32.mrf.mxu0
      %v666 = vadd.f32 0.0, %v665
      %v667 = vpop.f32.mrf.mxu0
      %v668 = vadd.f32 0.0, %v667
      %669 = vmatmul.bf16.gmra.mxu0 %v642
      %v670 = vpop.f32.mrf.mxu0
      %v671 = vadd.f32 0.0, %v670
      %v672 = vpop.f32.mrf.mxu0
      %v673 = vadd.f32 0.0, %v672
      %674 = vmatmul.bf16.gmra.mxu0 %v645
      %v675 = vpop.f32.mrf.mxu0
      %v676 = vadd.f32 0.0, %v675
      %v677 = vpop.f32.mrf.mxu0
      %v678 = vadd.f32 0.0, %v677
      %679 = vmatmul.bf16.gmra.mxu0 %v648
      %v680 = vpop.f32.mrf.mxu0
      %v681 = vadd.f32 0.0, %v680
      %v682 = vpop.f32.mrf.mxu0
      %v683 = vadd.f32 0.0, %v682
      %684 = vmatmul.bf16.gmra.mxu0 %v651
      %v685 = vpop.f32.mrf.mxu0
      %v686 = vadd.f32 0.0, %v685
      %v687 = vpop.f32.mrf.mxu0
      %v688 = vadd.f32 0.0, %v687
      %689 = vdwg.mxu0
      %v690 = vadd.f32 %v611, %v666
      %v691 = vadd.f32 %v612, %v668
      %v692 = vadd.f32 %v613, %v671
      %v693 = vadd.f32 %v614, %v673
      %v694 = vadd.f32 %v615, %v676
      %v695 = vadd.f32 %v616, %v678
      %v696 = vadd.f32 %v617, %v681
      %v697 = vadd.f32 %v618, %v683
      %v698 = vadd.f32 %v619, %v686
      %v699 = vadd.f32 %v620, %v688
      %v700 = vld [vmem:[#allocation2 + $0x12c] sm:$0xff]
      %v701 = vld [vmem:[#allocation2 + $0x134] sm:$0xff]
      %v702 = vld [vmem:[#allocation2 + $0x13c] sm:$0xff]
      %v703 = vld [vmem:[#allocation2 + $0x144] sm:$0xff]
      %v704 = vld [vmem:[#allocation2 + $0x14c] sm:$0xff]
      %v705 = vld [vmem:[#allocation2 + $0x154] sm:$0xff]
      %v706 = vld [vmem:[#allocation2 + $0x15c] sm:$0xff]
      %v707 = vld [vmem:[#allocation2 + $0x164] sm:$0xff]
      %v708 = vld [vmem:[#allocation2 + $0x16c] sm:$0xff]
      %v709 = vld [vmem:[#allocation2 + $0x174] sm:$0xff]
      %v710 = vpack.c.bf16 %v701, %v700
      %v711 = vpack.c.bf16 %v703, %v702
      %v712 = vpack.c.bf16 %v705, %v704
      %v713 = vpack.c.bf16 %v707, %v706
      %v714 = vpack.c.bf16 %v709, %v708
      %s715 = scalar_lea.vmem %s1, 8
      %v716 = vld [vmem:[%s715] sm:$0x3]
      %v718 = vsel %vm353, %v710, 0
      %v721 = vsel %vm353, %v711, 0
      %v724 = vsel %vm353, %v712, 0
      %v727 = vsel %vm353, %v713, 0
      %v730 = vsel %vm353, %v714, 0
      %v733 = vsel %vm452, %v716, 0
      %735 = vmatpush.bf16.msra.mxu0 0
      %736 = vmatpush.bf16.msra.mxu0 0
      %737 = vmatpush.bf16.msra.mxu0 0
      %738 = vmatpush.bf16.msra.mxu0 0
      %739 = vmatpush.bf16.msra.mxu0 0
      %740 = vmatpush.bf16.msra.mxu0 0
      %741 = vmatpush.bf16.msra.mxu0 0
      %742 = vmatpush.bf16.msra.mxu0 %v733
      %743 = vmatmul.bf16.gmra.mxu0 %v718
      %v744 = vpop.f32.mrf.mxu0
      %v745 = vadd.f32 0.0, %v744
      %v746 = vpop.f32.mrf.mxu0
      %v747 = vadd.f32 0.0, %v746
      %748 = vmatmul.bf16.gmra.mxu0 %v721
      %v749 = vpop.f32.mrf.mxu0
      %v750 = vadd.f32 0.0, %v749
      %v751 = vpop.f32.mrf.mxu0
      %v752 = vadd.f32 0.0, %v751
      %753 = vmatmul.bf16.gmra.mxu0 %v724
      %v754 = vpop.f32.mrf.mxu0
      %v755 = vadd.f32 0.0, %v754
      %v756 = vpop.f32.mrf.mxu0
      %v757 = vadd.f32 0.0, %v756
      %758 = vmatmul.bf16.gmra.mxu0 %v727
      %v759 = vpop.f32.mrf.mxu0
      %v760 = vadd.f32 0.0, %v759
      %v761 = vpop.f32.mrf.mxu0
      %v762 = vadd.f32 0.0, %v761
      %763 = vmatmul.bf16.gmra.mxu0 %v730
      %v764 = vpop.f32.mrf.mxu0
      %v765 = vadd.f32 0.0, %v764
      %v766 = vpop.f32.mrf.mxu0
      %v767 = vadd.f32 0.0, %v766
      %768 = vdwg.mxu0
      %v769 = vadd.f32 %v690, %v745
      %v770 = vadd.f32 %v691, %v747
      %v771 = vadd.f32 %v692, %v750
      %v772 = vadd.f32 %v693, %v752
      %v773 = vadd.f32 %v694, %v755
      %v774 = vadd.f32 %v695, %v757
      %v775 = vadd.f32 %v696, %v760
      %v776 = vadd.f32 %v697, %v762
      %v777 = vadd.f32 %v698, %v765
      %v778 = vadd.f32 %v699, %v767
      %v779 = vld [vmem:[%s3] sm:$0x3]
      %v780 = vld [vmem:[#allocation2 + $0xc9] sm:$0xff]
      %v781 = vld [vmem:[#allocation2 + $0xd1] sm:$0xff]
      %v782 = vld [vmem:[#allocation2 + $0xd9] sm:$0xff]
      %v783 = vld [vmem:[#allocation2 + $0xe1] sm:$0xff]
      %v784 = vld [vmem:[#allocation2 + $0xe9] sm:$0xff]
      %v785 = vld [vmem:[#allocation2 + $0xf1] sm:$0xff]
      %v786 = vld [vmem:[#allocation2 + $0xf9] sm:$0xff]
      %v787 = vld [vmem:[#allocation2 + $0x101] sm:$0xff]
      %v788 = vld [vmem:[#allocation2 + $0x109] sm:$0xff]
      %v789 = vld [vmem:[#allocation2 + $0x111] sm:$0xff]
      %v790 = vpack.c.bf16 %v781, %v780
      %v791 = vpack.c.bf16 %v783, %v782
      %v792 = vpack.c.bf16 %v785, %v784
      %v793 = vpack.c.bf16 %v787, %v786
      %v794 = vpack.c.bf16 %v789, %v788
      %s795 = scalar_lea.vmem %s1, 10
      %v796 = vld [vmem:[%s795] sm:$0x3]
      %v798 = vsel %vm353, %v790, 0
      %v801 = vsel %vm353, %v791, 0
      %v804 = vsel %vm353, %v792, 0
      %v807 = vsel %vm353, %v793, 0
      %v810 = vsel %vm353, %v794, 0
      %v813 = vsel %vm452, %v796, 0
      %815 = vmatpush.bf16.msra.mxu0 0
      %816 = vmatpush.bf16.msra.mxu0 0
      %817 = vmatpush.bf16.msra.mxu0 0
      %818 = vmatpush.bf16.msra.mxu0 0
      %819 = vmatpush.bf16.msra.mxu0 0
      %820 = vmatpush.bf16.msra.mxu0 0
      %821 = vmatpush.bf16.msra.mxu0 0
      %822 = vmatpush.bf16.msra.mxu0 %v813
      %823 = vmatmul.bf16.gmra.mxu0 %v798
      %v824 = vpop.f32.mrf.mxu0
      %v825 = vadd.f32 0.0, %v824
      %v826 = vpop.f32.mrf.mxu0
      %v827 = vadd.f32 0.0, %v826
      %828 = vmatmul.bf16.gmra.mxu0 %v801
      %v829 = vpop.f32.mrf.mxu0
      %v830 = vadd.f32 0.0, %v829
      %v831 = vpop.f32.mrf.mxu0
      %v832 = vadd.f32 0.0, %v831
      %833 = vmatmul.bf16.gmra.mxu0 %v804
      %v834 = vpop.f32.mrf.mxu0
      %v835 = vadd.f32 0.0, %v834
      %v836 = vpop.f32.mrf.mxu0
      %v837 = vadd.f32 0.0, %v836
      %838 = vmatmul.bf16.gmra.mxu0 %v807
      %v839 = vpop.f32.mrf.mxu0
      %v840 = vadd.f32 0.0, %v839
      %v841 = vpop.f32.mrf.mxu0
      %v842 = vadd.f32 0.0, %v841
      %843 = vmatmul.bf16.gmra.mxu0 %v810
      %v844 = vpop.f32.mrf.mxu0
      %v845 = vadd.f32 0.0, %v844
      %v846 = vpop.f32.mrf.mxu0
      %v847 = vadd.f32 0.0, %v846
      %848 = vdwg.mxu0
      %v849 = vadd.f32 %v769, %v825
      %v850 = vadd.f32 %v770, %v827
      %v851 = vadd.f32 %v771, %v830
      %v852 = vadd.f32 %v772, %v832
      %v853 = vadd.f32 %v773, %v835
      %v854 = vadd.f32 %v774, %v837
      %v855 = vadd.f32 %v775, %v840
      %v856 = vadd.f32 %v776, %v842
      %v857 = vadd.f32 %v777, %v845
      %v858 = vadd.f32 %v778, %v847
      %v859 = vld [vmem:[#allocation2 + $0xa] sm:$0xff]
      %v860 = vld [vmem:[#allocation2 + $0x12] sm:$0xff]
      %v861 = vld [vmem:[#allocation2 + $0x1a] sm:$0xff]
      %v862 = vld [vmem:[#allocation2 + $0x22] sm:$0xff]
      %v863 = vld [vmem:[#allocation2 + $0x2a] sm:$0xff]
      %v864 = vld [vmem:[#allocation2 + $0x32] sm:$0xff]
      %v865 = vld [vmem:[#allocation2 + $0x3a] sm:$0xff]
      %v866 = vld [vmem:[#allocation2 + $0x42] sm:$0xff]
      %v867 = vld [vmem:[#allocation2 + $0x4a] sm:$0xff]
      %v868 = vld [vmem:[#allocation2 + $0x52] sm:$0xff]
      %v869 = vpack.c.bf16 %v860, %v859
      %v870 = vpack.c.bf16 %v862, %v861
      %v871 = vpack.c.bf16 %v864, %v863
      %v872 = vpack.c.bf16 %v866, %v865
      %v873 = vpack.c.bf16 %v868, %v867
      %s874 = scalar_lea.vmem %s1, 12
      %v875 = vld [vmem:[%s874] sm:$0x3]
      %v877 = vsel %vm353, %v869, 0
      %v880 = vsel %vm353, %v870, 0
      %v883 = vsel %vm353, %v871, 0
      %v886 = vsel %vm353, %v872, 0
      %v889 = vsel %vm353, %v873, 0
      %v892 = vsel %vm452, %v875, 0
      %894 = vmatpush.bf16.msra.mxu0 0
      %895 = vmatpush.bf16.msra.mxu0 0
      %896 = vmatpush.bf16.msra.mxu0 0
      %897 = vmatpush.bf16.msra.mxu0 0
      %898 = vmatpush.bf16.msra.mxu0 0
      %899 = vmatpush.bf16.msra.mxu0 0
      %900 = vmatpush.bf16.msra.mxu0 0
      %901 = vmatpush.bf16.msra.mxu0 %v892
      %902 = vmatmul.bf16.gmra.mxu0 %v877
      %v903 = vpop.f32.mrf.mxu0
      %v904 = vadd.f32 0.0, %v903
      %v905 = vpop.f32.mrf.mxu0
      %v906 = vadd.f32 0.0, %v905
      %907 = vmatmul.bf16.gmra.mxu0 %v880
      %v908 = vpop.f32.mrf.mxu0
      %v909 = vadd.f32 0.0, %v908
      %v910 = vpop.f32.mrf.mxu0
      %v911 = vadd.f32 0.0, %v910
      %912 = vmatmul.bf16.gmra.mxu0 %v883
      %v913 = vpop.f32.mrf.mxu0
      %v914 = vadd.f32 0.0, %v913
      %v915 = vpop.f32.mrf.mxu0
      %v916 = vadd.f32 0.0, %v915
      %917 = vmatmul.bf16.gmra.mxu0 %v886
      %v918 = vpop.f32.mrf.mxu0
      %v919 = vadd.f32 0.0, %v918
      %v920 = vpop.f32.mrf.mxu0
      %v921 = vadd.f32 0.0, %v920
      %922 = vmatmul.bf16.gmra.mxu0 %v889
      %v923 = vpop.f32.mrf.mxu0
      %v924 = vadd.f32 0.0, %v923
      %v925 = vpop.f32.mrf.mxu0
      %v926 = vadd.f32 0.0, %v925
      %927 = vdwg.mxu0
      %v928 = vadd.f32 %v849, %v904
      %v929 = vadd.f32 %v850, %v906
      %v930 = vadd.f32 %v851, %v909
      %v931 = vadd.f32 %v852, %v911
      %v932 = vadd.f32 %v853, %v914
      %v933 = vadd.f32 %v854, %v916
      %v934 = vadd.f32 %v855, %v919
      %v935 = vadd.f32 %v856, %v921
      %v936 = vadd.f32 %v857, %v924
      %v937 = vadd.f32 %v858, %v926
      %v938 = vld [vmem:[#allocation2 + $0x6e] sm:$0xff]
      %v939 = vld [vmem:[#allocation2 + $0x76] sm:$0xff]
      %v940 = vld [vmem:[#allocation2 + $0x7e] sm:$0xff]
      %v941 = vld [vmem:[#allocation2 + $0x86] sm:$0xff]
      %v942 = vld [vmem:[#allocation2 + $0x8e] sm:$0xff]
      %v943 = vld [vmem:[#allocation2 + $0x96] sm:$0xff]
      %v944 = vld [vmem:[#allocation2 + $0x9e] sm:$0xff]
      %v945 = vld [vmem:[#allocation2 + $0xa6] sm:$0xff]
      %v946 = vld [vmem:[#allocation2 + $0xae] sm:$0xff]
      %v947 = vld [vmem:[#allocation2 + $0xb6] sm:$0xff]
      %v948 = vpack.c.bf16 %v939, %v938
      %v949 = vpack.c.bf16 %v941, %v940
      %v950 = vpack.c.bf16 %v943, %v942
      %v951 = vpack.c.bf16 %v945, %v944
      %v952 = vpack.c.bf16 %v947, %v946
      %s953 = scalar_lea.vmem %s1, 14
      %v954 = vld [vmem:[%s953] sm:$0x3]
      %v956 = vsel %vm353, %v948, 0
      %v959 = vsel %vm353, %v949, 0
      %v962 = vsel %vm353, %v950, 0
      %v965 = vsel %vm353, %v951, 0
      %v968 = vsel %vm353, %v952, 0
      %v971 = vsel %vm452, %v954, 0
      %973 = vmatpush.bf16.msra.mxu0 0
      %974 = vmatpush.bf16.msra.mxu0 0
      %975 = vmatpush.bf16.msra.mxu0 0
      %976 = vmatpush.bf16.msra.mxu0 0
      %977 = vmatpush.bf16.msra.mxu0 0
      %978 = vmatpush.bf16.msra.mxu0 0
      %979 = vmatpush.bf16.msra.mxu0 0
      %980 = vmatpush.bf16.msra.mxu0 %v971
      %981 = vmatmul.bf16.gmra.mxu0 %v956
      %v982 = vpop.f32.mrf.mxu0
      %v983 = vadd.f32 0.0, %v982
      %v984 = vpop.f32.mrf.mxu0
      %v985 = vadd.f32 0.0, %v984
      %986 = vmatmul.bf16.gmra.mxu0 %v959
      %v987 = vpop.f32.mrf.mxu0
      %v988 = vadd.f32 0.0, %v987
      %v989 = vpop.f32.mrf.mxu0
      %v990 = vadd.f32 0.0, %v989
      %991 = vmatmul.bf16.gmra.mxu0 %v962
      %v992 = vpop.f32.mrf.mxu0
      %v993 = vadd.f32 0.0, %v992
      %v994 = vpop.f32.mrf.mxu0
      %v995 = vadd.f32 0.0, %v994
      %996 = vmatmul.bf16.gmra.mxu0 %v965
      %v997 = vpop.f32.mrf.mxu0
      %v998 = vadd.f32 0.0, %v997
      %v999 = vpop.f32.mrf.mxu0
      %v1000 = vadd.f32 0.0, %v999
      %1001 = vmatmul.bf16.gmra.mxu0 %v968
      %v1002 = vpop.f32.mrf.mxu0
      %v1003 = vadd.f32 0.0, %v1002
      %v1004 = vpop.f32.mrf.mxu0
      %v1005 = vadd.f32 0.0, %v1004
      %1006 = vdwg.mxu0
      %v1007 = vadd.f32 %v928, %v983
      %v1008 = vadd.f32 %v929, %v985
      %v1009 = vadd.f32 %v930, %v988
      %v1010 = vadd.f32 %v931, %v990
      %v1011 = vadd.f32 %v932, %v993
      %v1012 = vadd.f32 %v933, %v995
      %v1013 = vadd.f32 %v934, %v998
      %v1014 = vadd.f32 %v935, %v1000
      %v1015 = vadd.f32 %v936, %v1003
      %v1016 = vadd.f32 %v937, %v1005
      %v1017 = vld [vmem:[#allocation2 + $0xb] sm:$0xff]
      %v1018 = vld [vmem:[#allocation2 + $0x13] sm:$0xff]
      %v1019 = vld [vmem:[#allocation2 + $0x1b] sm:$0xff]
      %v1020 = vld [vmem:[#allocation2 + $0x23] sm:$0xff]
      %v1021 = vld [vmem:[#allocation2 + $0x2b] sm:$0xff]
      %v1022 = vld [vmem:[#allocation2 + $0x33] sm:$0xff]
      %v1023 = vld [vmem:[#allocation2 + $0x3b] sm:$0xff]
      %v1024 = vld [vmem:[#allocation2 + $0x43] sm:$0xff]
      %v1025 = vld [vmem:[#allocation2 + $0x4b] sm:$0xff]
      %v1026 = vld [vmem:[#allocation2 + $0x53] sm:$0xff]
      %v1027 = vpack.c.bf16 %v1018, %v1017
      %v1028 = vpack.c.bf16 %v1020, %v1019
      %v1029 = vpack.c.bf16 %v1022, %v1021
      %v1030 = vpack.c.bf16 %v1024, %v1023
      %v1031 = vpack.c.bf16 %v1026, %v1025
      %s1032 = scalar_lea.vmem %s1, 16
      %v1033 = vld [vmem:[%s1032] sm:$0x3]
      %v1035 = vsel %vm353, %v1027, 0
      %v1038 = vsel %vm353, %v1028, 0
      %v1041 = vsel %vm353, %v1029, 0
      %v1044 = vsel %vm353, %v1030, 0
      %v1047 = vsel %vm353, %v1031, 0
      %v1050 = vsel %vm452, %v1033, 0
      %1052 = vmatpush.bf16.msra.mxu0 0
      %1053 = vmatpush.bf16.msra.mxu0 0
      %1054 = vmatpush.bf16.msra.mxu0 0
      %1055 = vmatpush.bf16.msra.mxu0 0
      %1056 = vmatpush.bf16.msra.mxu0 0
      %1057 = vmatpush.bf16.msra.mxu0 0
      %1058 = vmatpush.bf16.msra.mxu0 0
      %1059 = vmatpush.bf16.msra.mxu0 %v1050
      %1060 = vmatmul.bf16.gmra.mxu0 %v1035
      %v1061 = vpop.f32.mrf.mxu0
      %v1062 = vadd.f32 0.0, %v1061
      %v1063 = vpop.f32.mrf.mxu0
      %v1064 = vadd.f32 0.0, %v1063
      %1065 = vmatmul.bf16.gmra.mxu0 %v1038
      %v1066 = vpop.f32.mrf.mxu0
      %v1067 = vadd.f32 0.0, %v1066
      %v1068 = vpop.f32.mrf.mxu0
      %v1069 = vadd.f32 0.0, %v1068
      %1070 = vmatmul.bf16.gmra.mxu0 %v1041
      %v1071 = vpop.f32.mrf.mxu0
      %v1072 = vadd.f32 0.0, %v1071
      %v1073 = vpop.f32.mrf.mxu0
      %v1074 = vadd.f32 0.0, %v1073
      %1075 = vmatmul.bf16.gmra.mxu0 %v1044
      %v1076 = vpop.f32.mrf.mxu0
      %v1077 = vadd.f32 0.0, %v1076
      %v1078 = vpop.f32.mrf.mxu0
      %v1079 = vadd.f32 0.0, %v1078
      %1080 = vmatmul.bf16.gmra.mxu0 %v1047
      %v1081 = vpop.f32.mrf.mxu0
      %v1082 = vadd.f32 0.0, %v1081
      %v1083 = vpop.f32.mrf.mxu0
      %v1084 = vadd.f32 0.0, %v1083
      %1085 = vdwg.mxu0
      %v1086 = vadd.f32 %v1007, %v1062
      %v1087 = vadd.f32 %v1008, %v1064
      %v1088 = vadd.f32 %v1009, %v1067
      %v1089 = vadd.f32 %v1010, %v1069
      %v1090 = vadd.f32 %v1011, %v1072
      %v1091 = vadd.f32 %v1012, %v1074
      %v1092 = vadd.f32 %v1013, %v1077
      %v1093 = vadd.f32 %v1014, %v1079
      %v1094 = vadd.f32 %v1015, %v1082
      %v1095 = vadd.f32 %v1016, %v1084
      %v1096 = vld [vmem:[%s4] sm:$0x1]
      %v1098 = vperm.slane %v1096, 0
      %v1100 = vadd.f32 %v1086, %v1098
      %v1101 = vadd.f32 %v1087, %v1098
      %v1102 = vadd.f32 %v1088, %v1098
      %v1103 = vadd.f32 %v1089, %v1098
      %v1104 = vadd.f32 %v1090, %v1098
      %v1105 = vadd.f32 %v1091, %v1098
      %v1106 = vadd.f32 %v1092, %v1098
      %v1107 = vadd.f32 %v1093, %v1098
      %v1108 = vadd.f32 %v1094, %v1098
      %v1109 = vadd.f32 %v1095, %v1098
      %v1110 = vmax.f32 %v1100, 0.0
      %v1111 = vmax.f32 %v1101, 0.0
      %v1112 = vmax.f32 %v1102, 0.0
      %v1113 = vmax.f32 %v1103, 0.0
      %v1114 = vmax.f32 %v1104, 0.0
      %v1115 = vmax.f32 %v1105, 0.0
      %v1116 = vmax.f32 %v1106, 0.0
      %v1117 = vmax.f32 %v1107, 0.0
      %v1118 = vmax.f32 %v1108, 0.0
      %v1119 = vmax.f32 %v1109, 0.0
      %v1120 = vlaneseq
      %v1121 = vshrl.u32 %v1120, 7
      %v1122 = vadd.s32 %v1121, 8
      %v1123 = vadd.s32 %v1121, 16
      %v1124 = vadd.s32 %v1121, 24
      %v1125 = vadd.s32 %v1121, 32
      %v1126 = vadd.s32 %v1121, 40
      %v1127 = vadd.s32 %v1121, 48
      %v1128 = vadd.s32 %v1121, 56
      %v1129 = vadd.s32 %v1121, 64
      %v1130 = vadd.s32 %v1121, 72
      %vm1131 = vcmp.lt.s32.totalorder %v1121, 0
      %v1132 = vsub.s32 0, %v1121
      %v1133 = vsel %vm1131, %v1132, %v1121
      %v1134 = vand.u32 %v1133, 65535
      %v1135 = vshrl.u32 %v1133, 16
      %v1137 = vmul.u32 %v1134, 52429
      %v1138 = vmul.u32 %v1134, 52428
      %v1139 = vmul.u32 %v1135, 52429
      %v1140 = vmul.u32 %v1135, 52428
      %v1141 = vshll.u32 %v1138, 16
      %v1142 = vshrl.u32 %v1138, 16
      %v1143 = vshll.u32 %v1139, 16
      %v1144 = vshrl.u32 %v1139, 16
      %vm1145 = vc.u32 %v1137, %v1141
      %v1146 = vsel %vm1145, 1, 0
      %v1147 = vadd.s32 %v1137, %v1141
      %v1148 = vadd.s32 %v1140, %v1146
      %vm1149 = vc.u32 %v1147, %v1143
      %v1150 = vsel %vm1149, 1, 0
      %v1151 = vadd.s32 %v1147, %v1143
      %v1152 = vadd.s32 %v1148, %v1150
      %v1153 = vadd.s32 %v1152, %v1142
      %v1154 = vadd.s32 %v1153, %v1144
      %v1155 = vshrl.u32 %v1154, 3
      %v1156 = vmul.u32 %v1155, 10
      %v1157 = vsub.s32 %v1133, %v1156
      %v1158 = vsub.s32 0, %v1157
      %v1159 = vsel %vm1131, %v1158, %v1157
      %vm1160 = vcmp.lt.s32.totalorder %v1122, 0
      %v1161 = vsub.s32 0, %v1122
      %v1162 = vsel %vm1160, %v1161, %v1122
      %v1163 = vand.u32 %v1162, 65535
      %v1164 = vshrl.u32 %v1162, 16
      %v1166 = vmul.u32 %v1163, 52429
      %v1167 = vmul.u32 %v1163, 52428
      %v1168 = vmul.u32 %v1164, 52429
      %v1169 = vmul.u32 %v1164, 52428
      %v1170 = vshll.u32 %v1167, 16
      %v1171 = vshrl.u32 %v1167, 16
      %v1172 = vshll.u32 %v1168, 16
      %v1173 = vshrl.u32 %v1168, 16
      %vm1174 = vc.u32 %v1166, %v1170
      %v1175 = vsel %vm1174, 1, 0
      %v1176 = vadd.s32 %v1166, %v1170
      %v1177 = vadd.s32 %v1169, %v1175
      %vm1178 = vc.u32 %v1176, %v1172
      %v1179 = vsel %vm1178, 1, 0
      %v1180 = vadd.s32 %v1176, %v1172
      %v1181 = vadd.s32 %v1177, %v1179
      %v1182 = vadd.s32 %v1181, %v1171
      %v1183 = vadd.s32 %v1182, %v1173
      %v1184 = vshrl.u32 %v1183, 3
      %v1185 = vmul.u32 %v1184, 10
      %v1186 = vsub.s32 %v1162, %v1185
      %v1187 = vsub.s32 0, %v1186
      %v1188 = vsel %vm1160, %v1187, %v1186
      %vm1189 = vcmp.lt.s32.totalorder %v1123, 0
      %v1190 = vsub.s32 0, %v1123
      %v1191 = vsel %vm1189, %v1190, %v1123
      %v1192 = vand.u32 %v1191, 65535
      %v1193 = vshrl.u32 %v1191, 16
      %v1195 = vmul.u32 %v1192, 52429
      %v1196 = vmul.u32 %v1192, 52428
      %v1197 = vmul.u32 %v1193, 52429
      %v1198 = vmul.u32 %v1193, 52428
      %v1199 = vshll.u32 %v1196, 16
      %v1200 = vshrl.u32 %v1196, 16
      %v1201 = vshll.u32 %v1197, 16
      %v1202 = vshrl.u32 %v1197, 16
      %vm1203 = vc.u32 %v1195, %v1199
      %v1204 = vsel %vm1203, 1, 0
      %v1205 = vadd.s32 %v1195, %v1199
      %v1206 = vadd.s32 %v1198, %v1204
      %vm1207 = vc.u32 %v1205, %v1201
      %v1208 = vsel %vm1207, 1, 0
      %v1209 = vadd.s32 %v1205, %v1201
      %v1210 = vadd.s32 %v1206, %v1208
      %v1211 = vadd.s32 %v1210, %v1200
      %v1212 = vadd.s32 %v1211, %v1202
      %v1213 = vshrl.u32 %v1212, 3
      %v1214 = vmul.u32 %v1213, 10
      %v1215 = vsub.s32 %v1191, %v1214
      %v1216 = vsub.s32 0, %v1215
      %v1217 = vsel %vm1189, %v1216, %v1215
      %vm1218 = vcmp.lt.s32.totalorder %v1124, 0
      %v1219 = vsub.s32 0, %v1124
      %v1220 = vsel %vm1218, %v1219, %v1124
      %v1221 = vand.u32 %v1220, 65535
      %v1222 = vshrl.u32 %v1220, 16
      %v1224 = vmul.u32 %v1221, 52429
      %v1225 = vmul.u32 %v1221, 52428
      %v1226 = vmul.u32 %v1222, 52429
      %v1227 = vmul.u32 %v1222, 52428
      %v1228 = vshll.u32 %v1225, 16
      %v1229 = vshrl.u32 %v1225, 16
      %v1230 = vshll.u32 %v1226, 16
      %v1231 = vshrl.u32 %v1226, 16
      %vm1232 = vc.u32 %v1224, %v1228
      %v1233 = vsel %vm1232, 1, 0
      %v1234 = vadd.s32 %v1224, %v1228
      %v1235 = vadd.s32 %v1227, %v1233
      %vm1236 = vc.u32 %v1234, %v1230
      %v1237 = vsel %vm1236, 1, 0
      %v1238 = vadd.s32 %v1234, %v1230
      %v1239 = vadd.s32 %v1235, %v1237
      %v1240 = vadd.s32 %v1239, %v1229
      %v1241 = vadd.s32 %v1240, %v1231
      %v1242 = vshrl.u32 %v1241, 3
      %v1243 = vmul.u32 %v1242, 10
      %v1244 = vsub.s32 %v1220, %v1243
      %v1245 = vsub.s32 0, %v1244
      %v1246 = vsel %vm1218, %v1245, %v1244
      %vm1247 = vcmp.lt.s32.totalorder %v1125, 0
      %v1248 = vsub.s32 0, %v1125
      %v1249 = vsel %vm1247, %v1248, %v1125
      %v1250 = vand.u32 %v1249, 65535
      %v1251 = vshrl.u32 %v1249, 16
      %v1253 = vmul.u32 %v1250, 52429
      %v1254 = vmul.u32 %v1250, 52428
      %v1255 = vmul.u32 %v1251, 52429
      %v1256 = vmul.u32 %v1251, 52428
      %v1257 = vshll.u32 %v1254, 16
      %v1258 = vshrl.u32 %v1254, 16
      %v1259 = vshll.u32 %v1255, 16
      %v1260 = vshrl.u32 %v1255, 16
      %vm1261 = vc.u32 %v1253, %v1257
      %v1262 = vsel %vm1261, 1, 0
      %v1263 = vadd.s32 %v1253, %v1257
      %v1264 = vadd.s32 %v1256, %v1262
      %vm1265 = vc.u32 %v1263, %v1259
      %v1266 = vsel %vm1265, 1, 0
      %v1267 = vadd.s32 %v1263, %v1259
      %v1268 = vadd.s32 %v1264, %v1266
      %v1269 = vadd.s32 %v1268, %v1258
      %v1270 = vadd.s32 %v1269, %v1260
      %v1271 = vshrl.u32 %v1270, 3
      %v1272 = vmul.u32 %v1271, 10
      %v1273 = vsub.s32 %v1249, %v1272
      %v1274 = vsub.s32 0, %v1273
      %v1275 = vsel %vm1247, %v1274, %v1273
      %vm1276 = vcmp.lt.s32.totalorder %v1126, 0
      %v1277 = vsub.s32 0, %v1126
      %v1278 = vsel %vm1276, %v1277, %v1126
      %v1279 = vand.u32 %v1278, 65535
      %v1280 = vshrl.u32 %v1278, 16
      %v1282 = vmul.u32 %v1279, 52429
      %v1283 = vmul.u32 %v1279, 52428
      %v1284 = vmul.u32 %v1280, 52429
      %v1285 = vmul.u32 %v1280, 52428
      %v1286 = vshll.u32 %v1283, 16
      %v1287 = vshrl.u32 %v1283, 16
      %v1288 = vshll.u32 %v1284, 16
      %v1289 = vshrl.u32 %v1284, 16
      %vm1290 = vc.u32 %v1282, %v1286
      %v1291 = vsel %vm1290, 1, 0
      %v1292 = vadd.s32 %v1282, %v1286
      %v1293 = vadd.s32 %v1285, %v1291
      %vm1294 = vc.u32 %v1292, %v1288
      %v1295 = vsel %vm1294, 1, 0
      %v1296 = vadd.s32 %v1292, %v1288
      %v1297 = vadd.s32 %v1293, %v1295
      %v1298 = vadd.s32 %v1297, %v1287
      %v1299 = vadd.s32 %v1298, %v1289
      %v1300 = vshrl.u32 %v1299, 3
      %v1301 = vmul.u32 %v1300, 10
      %v1302 = vsub.s32 %v1278, %v1301
      %v1303 = vsub.s32 0, %v1302
      %v1304 = vsel %vm1276, %v1303, %v1302
      %vm1305 = vcmp.lt.s32.totalorder %v1127, 0
      %v1306 = vsub.s32 0, %v1127
      %v1307 = vsel %vm1305, %v1306, %v1127
      %v1308 = vand.u32 %v1307, 65535
      %v1309 = vshrl.u32 %v1307, 16
      %v1311 = vmul.u32 %v1308, 52429
      %v1312 = vmul.u32 %v1308, 52428
      %v1313 = vmul.u32 %v1309, 52429
      %v1314 = vmul.u32 %v1309, 52428
      %v1315 = vshll.u32 %v1312, 16
      %v1316 = vshrl.u32 %v1312, 16
      %v1317 = vshll.u32 %v1313, 16
      %v1318 = vshrl.u32 %v1313, 16
      %vm1319 = vc.u32 %v1311, %v1315
      %v1320 = vsel %vm1319, 1, 0
      %v1321 = vadd.s32 %v1311, %v1315
      %v1322 = vadd.s32 %v1314, %v1320
      %vm1323 = vc.u32 %v1321, %v1317
      %v1324 = vsel %vm1323, 1, 0
      %v1325 = vadd.s32 %v1321, %v1317
      %v1326 = vadd.s32 %v1322, %v1324
      %v1327 = vadd.s32 %v1326, %v1316
      %v1328 = vadd.s32 %v1327, %v1318
      %v1329 = vshrl.u32 %v1328, 3
      %v1330 = vmul.u32 %v1329, 10
      %v1331 = vsub.s32 %v1307, %v1330
      %v1332 = vsub.s32 0, %v1331
      %v1333 = vsel %vm1305, %v1332, %v1331
      %vm1334 = vcmp.lt.s32.totalorder %v1128, 0
      %v1335 = vsub.s32 0, %v1128
      %v1336 = vsel %vm1334, %v1335, %v1128
      %v1337 = vand.u32 %v1336, 65535
      %v1338 = vshrl.u32 %v1336, 16
      %v1340 = vmul.u32 %v1337, 52429
      %v1341 = vmul.u32 %v1337, 52428
      %v1342 = vmul.u32 %v1338, 52429
      %v1343 = vmul.u32 %v1338, 52428
      %v1344 = vshll.u32 %v1341, 16
      %v1345 = vshrl.u32 %v1341, 16
      %v1346 = vshll.u32 %v1342, 16
      %v1347 = vshrl.u32 %v1342, 16
      %vm1348 = vc.u32 %v1340, %v1344
      %v1349 = vsel %vm1348, 1, 0
      %v1350 = vadd.s32 %v1340, %v1344
      %v1351 = vadd.s32 %v1343, %v1349
      %vm1352 = vc.u32 %v1350, %v1346
      %v1353 = vsel %vm1352, 1, 0
      %v1354 = vadd.s32 %v1350, %v1346
      %v1355 = vadd.s32 %v1351, %v1353
      %v1356 = vadd.s32 %v1355, %v1345
      %v1357 = vadd.s32 %v1356, %v1347
      %v1358 = vshrl.u32 %v1357, 3
      %v1359 = vmul.u32 %v1358, 10
      %v1360 = vsub.s32 %v1336, %v1359
      %v1361 = vsub.s32 0, %v1360
      %v1362 = vsel %vm1334, %v1361, %v1360
      %vm1363 = vcmp.lt.s32.totalorder %v1129, 0
      %v1364 = vsub.s32 0, %v1129
      %v1365 = vsel %vm1363, %v1364, %v1129
      %v1366 = vand.u32 %v1365, 65535
      %v1367 = vshrl.u32 %v1365, 16
      %v1369 = vmul.u32 %v1366, 52429
      %v1370 = vmul.u32 %v1366, 52428
      %v1371 = vmul.u32 %v1367, 52429
      %v1372 = vmul.u32 %v1367, 52428
      %v1373 = vshll.u32 %v1370, 16
      %v1374 = vshrl.u32 %v1370, 16
      %v1375 = vshll.u32 %v1371, 16
      %v1376 = vshrl.u32 %v1371, 16
      %vm1377 = vc.u32 %v1369, %v1373
      %v1378 = vsel %vm1377, 1, 0
      %v1379 = vadd.s32 %v1369, %v1373
      %v1380 = vadd.s32 %v1372, %v1378
      %vm1381 = vc.u32 %v1379, %v1375
      %v1382 = vsel %vm1381, 1, 0
      %v1383 = vadd.s32 %v1379, %v1375
      %v1384 = vadd.s32 %v1380, %v1382
      %v1385 = vadd.s32 %v1384, %v1374
      %v1386 = vadd.s32 %v1385, %v1376
      %v1387 = vshrl.u32 %v1386, 3
      %v1388 = vmul.u32 %v1387, 10
      %v1389 = vsub.s32 %v1365, %v1388
      %v1390 = vsub.s32 0, %v1389
      %v1391 = vsel %vm1363, %v1390, %v1389
      %vm1392 = vcmp.lt.s32.totalorder %v1130, 0
      %v1393 = vsub.s32 0, %v1130
      %v1394 = vsel %vm1392, %v1393, %v1130
      %v1395 = vand.u32 %v1394, 65535
      %v1396 = vshrl.u32 %v1394, 16
      %v1398 = vmul.u32 %v1395, 52429
      %v1399 = vmul.u32 %v1395, 52428
      %v1400 = vmul.u32 %v1396, 52429
      %v1401 = vmul.u32 %v1396, 52428
      %v1402 = vshll.u32 %v1399, 16
      %v1403 = vshrl.u32 %v1399, 16
      %v1404 = vshll.u32 %v1400, 16
      %v1405 = vshrl.u32 %v1400, 16
      %vm1406 = vc.u32 %v1398, %v1402
      %v1407 = vsel %vm1406, 1, 0
      %v1408 = vadd.s32 %v1398, %v1402
      %v1409 = vadd.s32 %v1401, %v1407
      %vm1410 = vc.u32 %v1408, %v1404
      %v1411 = vsel %vm1410, 1, 0
      %v1412 = vadd.s32 %v1408, %v1404
      %v1413 = vadd.s32 %v1409, %v1411
      %v1414 = vadd.s32 %v1413, %v1403
      %v1415 = vadd.s32 %v1414, %v1405
      %v1416 = vshrl.u32 %v1415, 3
      %v1417 = vmul.u32 %v1416, 10
      %v1418 = vsub.s32 %v1394, %v1417
      %v1419 = vsub.s32 0, %v1418
      %v1420 = vsel %vm1392, %v1419, %v1418
      %vm1421 = vcmp.ne.s32.totalorder %v1159, 0
      %vm1422 = vcmp.ne.s32.totalorder %v1188, 0
      %vm1423 = vcmp.ne.s32.totalorder %v1217, 0
      %vm1424 = vcmp.ne.s32.totalorder %v1246, 0
      %vm1425 = vcmp.ne.s32.totalorder %v1275, 0
      %vm1426 = vcmp.ne.s32.totalorder %v1304, 0
      %vm1427 = vcmp.ne.s32.totalorder %v1333, 0
      %vm1428 = vcmp.ne.s32.totalorder %v1362, 0
      %vm1429 = vcmp.ne.s32.totalorder %v1391, 0
      %vm1430 = vcmp.ne.s32.totalorder %v1420, 0
      %vm1431 = vcmp.lt.s32.totalorder %v1159, 0
      %vm1432 = vcmp.lt.s32.totalorder %v1188, 0
      %vm1433 = vcmp.lt.s32.totalorder %v1217, 0
      %vm1434 = vcmp.lt.s32.totalorder %v1246, 0
      %vm1435 = vcmp.lt.s32.totalorder %v1275, 0
      %vm1436 = vcmp.lt.s32.totalorder %v1304, 0
      %vm1437 = vcmp.lt.s32.totalorder %v1333, 0
      %vm1438 = vcmp.lt.s32.totalorder %v1362, 0
      %vm1439 = vcmp.lt.s32.totalorder %v1391, 0
      %vm1440 = vcmp.lt.s32.totalorder %v1420, 0
      %vm1441 = vmand %vm1431, %vm1421
      %vm1442 = vmand %vm1432, %vm1422
      %vm1443 = vmand %vm1433, %vm1423
      %vm1444 = vmand %vm1434, %vm1424
      %vm1445 = vmand %vm1435, %vm1425
      %vm1446 = vmand %vm1436, %vm1426
      %vm1447 = vmand %vm1437, %vm1427
      %vm1448 = vmand %vm1438, %vm1428
      %vm1449 = vmand %vm1439, %vm1429
      %vm1450 = vmand %vm1440, %vm1430
      %v1451 = vadd.s32 %v1159, 10
      %v1452 = vadd.s32 %v1188, 10
      %v1453 = vadd.s32 %v1217, 10
      %v1454 = vadd.s32 %v1246, 10
      %v1455 = vadd.s32 %v1275, 10
      %v1456 = vadd.s32 %v1304, 10
      %v1457 = vadd.s32 %v1333, 10
      %v1458 = vadd.s32 %v1362, 10
      %v1459 = vadd.s32 %v1391, 10
      %v1460 = vadd.s32 %v1420, 10
      %v1461 = vsel %vm1441, %v1451, %v1159
      %v1462 = vsel %vm1442, %v1452, %v1188
      %v1463 = vsel %vm1443, %v1453, %v1217
      %v1464 = vsel %vm1444, %v1454, %v1246
      %v1465 = vsel %vm1445, %v1455, %v1275
      %v1466 = vsel %vm1446, %v1456, %v1304
      %v1467 = vsel %vm1447, %v1457, %v1333
      %v1468 = vsel %vm1448, %v1458, %v1362
      %v1469 = vsel %vm1449, %v1459, %v1391
      %v1470 = vsel %vm1450, %v1460, %v1420
      %vm1471 = vcmp.lt.s32.totalorder %v1461, 8
      %vm1472 = vcmp.lt.s32.totalorder %v1462, 8
      %vm1473 = vcmp.lt.s32.totalorder %v1463, 8
      %vm1474 = vcmp.lt.s32.totalorder %v1464, 8
      %vm1475 = vcmp.lt.s32.totalorder %v1465, 8
      %vm1476 = vcmp.lt.s32.totalorder %v1466, 8
      %vm1477 = vcmp.lt.s32.totalorder %v1467, 8
      %vm1478 = vcmp.lt.s32.totalorder %v1468, 8
      %vm1479 = vcmp.lt.s32.totalorder %v1469, 8
      %vm1480 = vcmp.lt.s32.totalorder %v1470, 8
      %v1481 = vsel %vm1471, 1, 0
      %v1482 = vsel %vm1472, 1, 0
      %v1483 = vsel %vm1473, 1, 0
      %v1484 = vsel %vm1474, 1, 0
      %v1485 = vsel %vm1475, 1, 0
      %v1486 = vsel %vm1476, 1, 0
      %v1487 = vsel %vm1477, 1, 0
      %v1488 = vsel %vm1478, 1, 0
      %v1489 = vsel %vm1479, 1, 0
      %v1490 = vsel %vm1480, 1, 0
      %vm1491 = vcmp.eq.s32.totalorder %v1481, 1
      %vm1492 = vcmp.eq.s32.totalorder %v1482, 1
      %vm1493 = vcmp.eq.s32.totalorder %v1483, 1
      %vm1494 = vcmp.eq.s32.totalorder %v1484, 1
      %vm1495 = vcmp.eq.s32.totalorder %v1485, 1
      %vm1496 = vcmp.eq.s32.totalorder %v1486, 1
      %vm1497 = vcmp.eq.s32.totalorder %v1487, 1
      %vm1498 = vcmp.eq.s32.totalorder %v1488, 1
      %vm1499 = vcmp.eq.s32.totalorder %v1489, 1
      %vm1500 = vcmp.eq.s32.totalorder %v1490, 1
      %v1501 = vsel %vm1491, %v1110, 0.0
      %v1502 = vsel %vm1492, %v1111, 0.0
      %v1503 = vsel %vm1493, %v1112, 0.0
      %v1504 = vsel %vm1494, %v1113, 0.0
      %v1505 = vsel %vm1495, %v1114, 0.0
      %v1506 = vsel %vm1496, %v1115, 0.0
      %v1507 = vsel %vm1497, %v1116, 0.0
      %v1508 = vsel %vm1498, %v1117, 0.0
      %v1509 = vsel %vm1499, %v1118, 0.0
      %v1510 = vsel %vm1500, %v1119, 0.0
      %vm1511 = vcmask 64512
      %1512 = vst.msk [vmem:[#allocation3] sm:$0xff] %vm1511, 0.0
      %1513 = vst.msk [vmem:[#allocation3 + $0x8] sm:$0xff] %vm1511, 0.0
      %1514 = vst.msk [vmem:[#allocation3 + $0x10] sm:$0xff] %vm1511, %v1501
      %1515 = vst.msk [vmem:[#allocation3 + $0x18] sm:$0xff] %vm1511, %v1502
      %1516 = vst.msk [vmem:[#allocation3 + $0x20] sm:$0xff] %vm1511, %v1503
      %1517 = vst.msk [vmem:[#allocation3 + $0x28] sm:$0xff] %vm1511, %v1504
      %1518 = vst.msk [vmem:[#allocation3 + $0x30] sm:$0xff] %vm1511, %v1505
      %1519 = vst.msk [vmem:[#allocation3 + $0x38] sm:$0xff] %vm1511, %v1506
      %1520 = vst.msk [vmem:[#allocation3 + $0x40] sm:$0xff] %vm1511, %v1507
      %1521 = vst.msk [vmem:[#allocation3 + $0x48] sm:$0xff] %vm1511, %v1508
      %1522 = vst.msk [vmem:[#allocation3 + $0x50] sm:$0xff] %vm1511, %v1509
      %1523 = vst.msk [vmem:[#allocation3 + $0x58] sm:$0xff] %vm1511, %v1510
      %1524 = vst.msk [vmem:[#allocation3 + $0x60] sm:$0xff] %vm1511, 0.0
      %1525 = vst.msk [vmem:[#allocation3 + $0x68] sm:$0xff] %vm1511, 0.0
      %vm1526 = vcmask 59392
      %1527 = vst.msk [vmem:[#allocation3 + $0x70] sm:$0x7] %vm1526, 0.0
      %v1528 = vld [vmem:[#allocation3 + $0x5] sm:$0xff]
      %v1529 = vld [vmem:[#allocation3 + $0xd] sm:$0xff]
      %v1530 = vld [vmem:[#allocation3 + $0x15] sm:$0xff]
      %v1531 = vld [vmem:[#allocation3 + $0x1d] sm:$0xff]
      %v1532 = vld [vmem:[#allocation3 + $0x25] sm:$0xff]
      %v1533 = vld [vmem:[#allocation3 + $0x2d] sm:$0xff]
      %v1534 = vld [vmem:[#allocation3 + $0x35] sm:$0xff]
      %v1535 = vld [vmem:[#allocation3 + $0x3d] sm:$0xff]
      %v1536 = vld [vmem:[#allocation3 + $0x45] sm:$0xff]
      %v1537 = vld [vmem:[#allocation3 + $0x4d] sm:$0xff]
      %v1538 = vpack.c.bf16 %v1529, %v1528
      %v1539 = vpack.c.bf16 %v1531, %v1530
      %v1540 = vpack.c.bf16 %v1533, %v1532
      %v1541 = vpack.c.bf16 %v1535, %v1534
      %v1542 = vpack.c.bf16 %v1537, %v1536
      %v1543 = vld [vmem:[%s2] sm:$0xf]
      %v1545 = vsel %vm1511, %v1538, 0
      %v1548 = vsel %vm1511, %v1539, 0
      %v1551 = vsel %vm1511, %v1540, 0
      %v1554 = vsel %vm1511, %v1541, 0
      %v1557 = vsel %vm1511, %v1542, 0
      %vm1559 = vcmask 1043456
      %v1561 = vsel %vm1559, %v1543, 0
      %1563 = vmatpush.bf16.msra.mxu0 0
      %1564 = vmatpush.bf16.msra.mxu0 0
      %1565 = vmatpush.bf16.msra.mxu0 0
      %1566 = vmatpush.bf16.msra.mxu0 0
      %1567 = vmatpush.bf16.msra.mxu0 0
      %1568 = vmatpush.bf16.msra.mxu0 0
      %1569 = vmatpush.bf16.msra.mxu0 0
      %1570 = vmatpush.bf16.msra.mxu0 %v1561
      %1571 = vmatmul.bf16.gmra.mxu0 %v1545
      %v1572 = vpop.f32.mrf.mxu0
      %v1573 = vadd.f32 0.0, %v1572
      %v1574 = vpop.f32.mrf.mxu0
      %v1575 = vadd.f32 0.0, %v1574
      %1576 = vmatmul.bf16.gmra.mxu0 %v1548
      %v1577 = vpop.f32.mrf.mxu0
      %v1578 = vadd.f32 0.0, %v1577
      %v1579 = vpop.f32.mrf.mxu0
      %v1580 = vadd.f32 0.0, %v1579
      %1581 = vmatmul.bf16.gmra.mxu0 %v1551
      %v1582 = vpop.f32.mrf.mxu0
      %v1583 = vadd.f32 0.0, %v1582
      %v1584 = vpop.f32.mrf.mxu0
      %v1585 = vadd.f32 0.0, %v1584
      %1586 = vmatmul.bf16.gmra.mxu0 %v1554
      %v1587 = vpop.f32.mrf.mxu0
      %v1588 = vadd.f32 0.0, %v1587
      %v1589 = vpop.f32.mrf.mxu0
      %v1590 = vadd.f32 0.0, %v1589
      %1591 = vmatmul.bf16.gmra.mxu0 %v1557
      %v1592 = vpop.f32.mrf.mxu0
      %v1593 = vadd.f32 0.0, %v1592
      %v1594 = vpop.f32.mrf.mxu0
      %v1595 = vadd.f32 0.0, %v1594
      %1596 = vdwg.mxu0
      %v1598 = vsel %vm452, %v779, 0
      %1600 = vmatpush.bf16.msra.mxu0 0
      %1601 = vmatpush.bf16.msra.mxu0 0
      %1602 = vmatpush.bf16.msra.mxu0 0
      %1603 = vmatpush.bf16.msra.mxu0 0
      %1604 = vmatpush.bf16.msra.mxu0 0
      %1605 = vmatpush.bf16.msra.mxu0 0
      %1606 = vmatpush.bf16.msra.mxu0 0
      %1607 = vmatpush.bf16.msra.mxu0 %v1598
      %1608 = vmatmul.bf16.gmra.mxu0 %v718
      %v1609 = vpop.f32.mrf.mxu0
      %v1610 = vadd.f32 %v1573, %v1609
      %v1611 = vpop.f32.mrf.mxu0
      %v1612 = vadd.f32 %v1575, %v1611
      %1613 = vmatmul.bf16.gmra.mxu0 %v721
      %v1614 = vpop.f32.mrf.mxu0
      %v1615 = vadd.f32 %v1578, %v1614
      %v1616 = vpop.f32.mrf.mxu0
      %v1617 = vadd.f32 %v1580, %v1616
      %1618 = vmatmul.bf16.gmra.mxu0 %v724
      %v1619 = vpop.f32.mrf.mxu0
      %v1620 = vadd.f32 %v1583, %v1619
      %v1621 = vpop.f32.mrf.mxu0
      %v1622 = vadd.f32 %v1585, %v1621
      %1623 = vmatmul.bf16.gmra.mxu0 %v727
      %v1624 = vpop.f32.mrf.mxu0
      %v1625 = vadd.f32 %v1588, %v1624
      %v1626 = vpop.f32.mrf.mxu0
      %v1627 = vadd.f32 %v1590, %v1626
      %1628 = vmatmul.bf16.gmra.mxu0 %v730
      %v1629 = vpop.f32.mrf.mxu0
      %v1630 = vadd.f32 %v1593, %v1629
      %v1631 = vpop.f32.mrf.mxu0
      %v1632 = vadd.f32 %v1595, %v1631
      %1633 = vdwg.mxu0
      %v1634 = vld [vmem:[#allocation3 + $0x6] sm:$0xff]
      %v1635 = vld [vmem:[#allocation3 + $0xe] sm:$0xff]
      %v1636 = vld [vmem:[#allocation3 + $0x16] sm:$0xff]
      %v1637 = vld [vmem:[#allocation3 + $0x1e] sm:$0xff]
      %v1638 = vld [vmem:[#allocation3 + $0x26] sm:$0xff]
      %v1639 = vld [vmem:[#allocation3 + $0x2e] sm:$0xff]
      %v1640 = vld [vmem:[#allocation3 + $0x36] sm:$0xff]
      %v1641 = vld [vmem:[#allocation3 + $0x3e] sm:$0xff]
      %v1642 = vld [vmem:[#allocation3 + $0x46] sm:$0xff]
      %v1643 = vld [vmem:[#allocation3 + $0x4e] sm:$0xff]
      %v1644 = vpack.c.bf16 %v1635, %v1634
      %v1645 = vpack.c.bf16 %v1637, %v1636
      %v1646 = vpack.c.bf16 %v1639, %v1638
      %v1647 = vpack.c.bf16 %v1641, %v1640
      %v1648 = vpack.c.bf16 %v1643, %v1642
      %s1649 = scalar_lea.vmem %s2, 4
      %v1650 = vld [vmem:[%s1649] sm:$0xf]
      %v1652 = vsel %vm1511, %v1644, 0
      %v1655 = vsel %vm1511, %v1645, 0
      %v1658 = vsel %vm1511, %v1646, 0
      %v1661 = vsel %vm1511, %v1647, 0
      %v1664 = vsel %vm1511, %v1648, 0
      %v1667 = vsel %vm1559, %v1650, 0
      %1669 = vmatpush.bf16.msra.mxu0 0
      %1670 = vmatpush.bf16.msra.mxu0 0
      %1671 = vmatpush.bf16.msra.mxu0 0
      %1672 = vmatpush.bf16.msra.mxu0 0
      %1673 = vmatpush.bf16.msra.mxu0 0
      %1674 = vmatpush.bf16.msra.mxu0 0
      %1675 = vmatpush.bf16.msra.mxu0 0
      %1676 = vmatpush.bf16.msra.mxu0 %v1667
      %1677 = vmatmul.bf16.gmra.mxu0 %v1652
      %v1678 = vpop.f32.mrf.mxu0
      %v1679 = vadd.f32 0.0, %v1678
      %v1680 = vpop.f32.mrf.mxu0
      %v1681 = vadd.f32 0.0, %v1680
      %1682 = vmatmul.bf16.gmra.mxu0 %v1655
      %v1683 = vpop.f32.mrf.mxu0
      %v1684 = vadd.f32 0.0, %v1683
      %v1685 = vpop.f32.mrf.mxu0
      %v1686 = vadd.f32 0.0, %v1685
      %1687 = vmatmul.bf16.gmra.mxu0 %v1658
      %v1688 = vpop.f32.mrf.mxu0
      %v1689 = vadd.f32 0.0, %v1688
      %v1690 = vpop.f32.mrf.mxu0
      %v1691 = vadd.f32 0.0, %v1690
      %1692 = vmatmul.bf16.gmra.mxu0 %v1661
      %v1693 = vpop.f32.mrf.mxu0
      %v1694 = vadd.f32 0.0, %v1693
      %v1695 = vpop.f32.mrf.mxu0
      %v1696 = vadd.f32 0.0, %v1695
      %1697 = vmatmul.bf16.gmra.mxu0 %v1664
      %v1698 = vpop.f32.mrf.mxu0
      %v1699 = vadd.f32 0.0, %v1698
      %v1700 = vpop.f32.mrf.mxu0
      %v1701 = vadd.f32 0.0, %v1700
      %1702 = vdwg.mxu0
      %v1703 = vadd.f32 %v1610, %v1679
      %v1704 = vadd.f32 %v1612, %v1681
      %v1705 = vadd.f32 %v1615, %v1684
      %v1706 = vadd.f32 %v1617, %v1686
      %v1707 = vadd.f32 %v1620, %v1689
      %v1708 = vadd.f32 %v1622, %v1691
      %v1709 = vadd.f32 %v1625, %v1694
      %v1710 = vadd.f32 %v1627, %v1696
      %v1711 = vadd.f32 %v1630, %v1699
      %v1712 = vadd.f32 %v1632, %v1701
      %v1713 = vld [vmem:[#allocation3 + $0x7] sm:$0xff]
      %v1714 = vld [vmem:[#allocation3 + $0xf] sm:$0xff]
      %v1715 = vld [vmem:[#allocation3 + $0x17] sm:$0xff]
      %v1716 = vld [vmem:[#allocation3 + $0x1f] sm:$0xff]
      %v1717 = vld [vmem:[#allocation3 + $0x27] sm:$0xff]
      %v1718 = vld [vmem:[#allocation3 + $0x2f] sm:$0xff]
      %v1719 = vld [vmem:[#allocation3 + $0x37] sm:$0xff]
      %v1720 = vld [vmem:[#allocation3 + $0x3f] sm:$0xff]
      %v1721 = vld [vmem:[#allocation3 + $0x47] sm:$0xff]
      %v1722 = vld [vmem:[#allocation3 + $0x4f] sm:$0xff]
      %v1723 = vpack.c.bf16 %v1714, %v1713
      %v1724 = vpack.c.bf16 %v1716, %v1715
      %v1725 = vpack.c.bf16 %v1718, %v1717
      %v1726 = vpack.c.bf16 %v1720, %v1719
      %v1727 = vpack.c.bf16 %v1722, %v1721
      %s1728 = scalar_lea.vmem %s2, 8
      %v1729 = vld [vmem:[%s1728] sm:$0xf]
      %v1731 = vsel %vm1511, %v1723, 0
      %v1734 = vsel %vm1511, %v1724, 0
      %v1737 = vsel %vm1511, %v1725, 0
      %v1740 = vsel %vm1511, %v1726, 0
      %v1743 = vsel %vm1511, %v1727, 0
      %v1746 = vsel %vm1559, %v1729, 0
      %1748 = vmatpush.bf16.msra.mxu0 0
      %1749 = vmatpush.bf16.msra.mxu0 0
      %1750 = vmatpush.bf16.msra.mxu0 0
      %1751 = vmatpush.bf16.msra.mxu0 0
      %1752 = vmatpush.bf16.msra.mxu0 0
      %1753 = vmatpush.bf16.msra.mxu0 0
      %1754 = vmatpush.bf16.msra.mxu0 0
      %1755 = vmatpush.bf16.msra.mxu0 %v1746
      %1756 = vmatmul.bf16.gmra.mxu0 %v1731
      %v1757 = vpop.f32.mrf.mxu0
      %v1758 = vadd.f32 0.0, %v1757
      %v1759 = vpop.f32.mrf.mxu0
      %v1760 = vadd.f32 0.0, %v1759
      %1761 = vmatmul.bf16.gmra.mxu0 %v1734
      %v1762 = vpop.f32.mrf.mxu0
      %v1763 = vadd.f32 0.0, %v1762
      %v1764 = vpop.f32.mrf.mxu0
      %v1765 = vadd.f32 0.0, %v1764
      %1766 = vmatmul.bf16.gmra.mxu0 %v1737
      %v1767 = vpop.f32.mrf.mxu0
      %v1768 = vadd.f32 0.0, %v1767
      %v1769 = vpop.f32.mrf.mxu0
      %v1770 = vadd.f32 0.0, %v1769
      %1771 = vmatmul.bf16.gmra.mxu0 %v1740
      %v1772 = vpop.f32.mrf.mxu0
      %v1773 = vadd.f32 0.0, %v1772
      %v1774 = vpop.f32.mrf.mxu0
      %v1775 = vadd.f32 0.0, %v1774
      %1776 = vmatmul.bf16.gmra.mxu0 %v1743
      %v1777 = vpop.f32.mrf.mxu0
      %v1778 = vadd.f32 0.0, %v1777
      %v1779 = vpop.f32.mrf.mxu0
      %v1780 = vadd.f32 0.0, %v1779
      %1781 = vdwg.mxu0
      %v1782 = vadd.f32 %v1703, %v1758
      %v1783 = vadd.f32 %v1704, %v1760
      %v1784 = vadd.f32 %v1705, %v1763
      %v1785 = vadd.f32 %v1706, %v1765
      %v1786 = vadd.f32 %v1707, %v1768
      %v1787 = vadd.f32 %v1708, %v1770
      %v1788 = vadd.f32 %v1709, %v1773
      %v1789 = vadd.f32 %v1710, %v1775
      %v1790 = vadd.f32 %v1711, %v1778
      %v1791 = vadd.f32 %v1712, %v1780
      %v1792 = vld [vmem:[#allocation3 + $0xf] sm:$0xff]
      %v1793 = vld [vmem:[#allocation3 + $0x17] sm:$0xff]
      %v1794 = vld [vmem:[#allocation3 + $0x1f] sm:$0xff]
      %v1795 = vld [vmem:[#allocation3 + $0x27] sm:$0xff]
      %v1796 = vld [vmem:[#allocation3 + $0x2f] sm:$0xff]
      %v1797 = vld [vmem:[#allocation3 + $0x37] sm:$0xff]
      %v1798 = vld [vmem:[#allocation3 + $0x3f] sm:$0xff]
      %v1799 = vld [vmem:[#allocation3 + $0x47] sm:$0xff]
      %v1800 = vld [vmem:[#allocation3 + $0x4f] sm:$0xff]
      %v1801 = vld [vmem:[#allocation3 + $0x57] sm:$0xff]
      %v1802 = vpack.c.bf16 %v1793, %v1792
      %v1803 = vpack.c.bf16 %v1795, %v1794
      %v1804 = vpack.c.bf16 %v1797, %v1796
      %v1805 = vpack.c.bf16 %v1799, %v1798
      %v1806 = vpack.c.bf16 %v1801, %v1800
      %s1807 = scalar_lea.vmem %s2, 12
      %v1808 = vld [vmem:[%s1807] sm:$0xf]
      %v1810 = vsel %vm1511, %v1802, 0
      %v1813 = vsel %vm1511, %v1803, 0
      %v1816 = vsel %vm1511, %v1804, 0
      %v1819 = vsel %vm1511, %v1805, 0
      %v1822 = vsel %vm1511, %v1806, 0
      %v1825 = vsel %vm1559, %v1808, 0
      %1827 = vmatpush.bf16.msra.mxu0 0
      %1828 = vmatpush.bf16.msra.mxu0 0
      %1829 = vmatpush.bf16.msra.mxu0 0
      %1830 = vmatpush.bf16.msra.mxu0 0
      %1831 = vmatpush.bf16.msra.mxu0 0
      %1832 = vmatpush.bf16.msra.mxu0 0
      %1833 = vmatpush.bf16.msra.mxu0 0
      %1834 = vmatpush.bf16.msra.mxu0 %v1825
      %1835 = vmatmul.bf16.gmra.mxu0 %v1810
      %v1836 = vpop.f32.mrf.mxu0
      %v1837 = vadd.f32 0.0, %v1836
      %v1838 = vpop.f32.mrf.mxu0
      %v1839 = vadd.f32 0.0, %v1838
      %1840 = vmatmul.bf16.gmra.mxu0 %v1813
      %v1841 = vpop.f32.mrf.mxu0
      %v1842 = vadd.f32 0.0, %v1841
      %v1843 = vpop.f32.mrf.mxu0
      %v1844 = vadd.f32 0.0, %v1843
      %1845 = vmatmul.bf16.gmra.mxu0 %v1816
      %v1846 = vpop.f32.mrf.mxu0
      %v1847 = vadd.f32 0.0, %v1846
      %v1848 = vpop.f32.mrf.mxu0
      %v1849 = vadd.f32 0.0, %v1848
      %1850 = vmatmul.bf16.gmra.mxu0 %v1819
      %v1851 = vpop.f32.mrf.mxu0
      %v1852 = vadd.f32 0.0, %v1851
      %v1853 = vpop.f32.mrf.mxu0
      %v1854 = vadd.f32 0.0, %v1853
      %1855 = vmatmul.bf16.gmra.mxu0 %v1822
      %v1856 = vpop.f32.mrf.mxu0
      %v1857 = vadd.f32 0.0, %v1856
      %v1858 = vpop.f32.mrf.mxu0
      %v1859 = vadd.f32 0.0, %v1858
      %1860 = vdwg.mxu0
      %v1861 = vadd.f32 %v1782, %v1837
      %v1862 = vadd.f32 %v1783, %v1839
      %v1863 = vadd.f32 %v1784, %v1842
      %v1864 = vadd.f32 %v1785, %v1844
      %v1865 = vadd.f32 %v1786, %v1847
      %v1866 = vadd.f32 %v1787, %v1849
      %v1867 = vadd.f32 %v1788, %v1852
      %v1868 = vadd.f32 %v1789, %v1854
      %v1869 = vadd.f32 %v1790, %v1857
      %v1870 = vadd.f32 %v1791, %v1859
      %v1871 = vld [vmem:[#allocation3 + $0x10] sm:$0xff]
      %v1872 = vld [vmem:[#allocation3 + $0x18] sm:$0xff]
      %v1873 = vld [vmem:[#allocation3 + $0x20] sm:$0xff]
      %v1874 = vld [vmem:[#allocation3 + $0x28] sm:$0xff]
      %v1875 = vld [vmem:[#allocation3 + $0x30] sm:$0xff]
      %v1876 = vld [vmem:[#allocation3 + $0x38] sm:$0xff]
      %v1877 = vld [vmem:[#allocation3 + $0x40] sm:$0xff]
      %v1878 = vld [vmem:[#allocation3 + $0x48] sm:$0xff]
      %v1879 = vld [vmem:[#allocation3 + $0x50] sm:$0xff]
      %v1880 = vld [vmem:[#allocation3 + $0x58] sm:$0xff]
      %v1881 = vpack.c.bf16 %v1872, %v1871
      %v1882 = vpack.c.bf16 %v1874, %v1873
      %v1883 = vpack.c.bf16 %v1876, %v1875
      %v1884 = vpack.c.bf16 %v1878, %v1877
      %v1885 = vpack.c.bf16 %v1880, %v1879
      %s1886 = scalar_lea.vmem %s2, 16
      %v1887 = vld [vmem:[%s1886] sm:$0xf]
      %v1889 = vsel %vm1511, %v1881, 0
      %v1892 = vsel %vm1511, %v1882, 0
      %v1895 = vsel %vm1511, %v1883, 0
      %v1898 = vsel %vm1511, %v1884, 0
      %v1901 = vsel %vm1511, %v1885, 0
      %v1904 = vsel %vm1559, %v1887, 0
      %1906 = vmatpush.bf16.msra.mxu0 0
      %1907 = vmatpush.bf16.msra.mxu0 0
      %1908 = vmatpush.bf16.msra.mxu0 0
      %1909 = vmatpush.bf16.msra.mxu0 0
      %1910 = vmatpush.bf16.msra.mxu0 0
      %1911 = vmatpush.bf16.msra.mxu0 0
      %1912 = vmatpush.bf16.msra.mxu0 0
      %1913 = vmatpush.bf16.msra.mxu0 %v1904
      %1914 = vmatmul.bf16.gmra.mxu0 %v1889
      %v1915 = vpop.f32.mrf.mxu0
      %v1916 = vadd.f32 0.0, %v1915
      %v1917 = vpop.f32.mrf.mxu0
      %v1918 = vadd.f32 0.0, %v1917
      %1919 = vmatmul.bf16.gmra.mxu0 %v1892
      %v1920 = vpop.f32.mrf.mxu0
      %v1921 = vadd.f32 0.0, %v1920
      %v1922 = vpop.f32.mrf.mxu0
      %v1923 = vadd.f32 0.0, %v1922
      %1924 = vmatmul.bf16.gmra.mxu0 %v1895
      %v1925 = vpop.f32.mrf.mxu0
      %v1926 = vadd.f32 0.0, %v1925
      %v1927 = vpop.f32.mrf.mxu0
      %v1928 = vadd.f32 0.0, %v1927
      %1929 = vmatmul.bf16.gmra.mxu0 %v1898
      %v1930 = vpop.f32.mrf.mxu0
      %v1931 = vadd.f32 0.0, %v1930
      %v1932 = vpop.f32.mrf.mxu0
      %v1933 = vadd.f32 0.0, %v1932
      %1934 = vmatmul.bf16.gmra.mxu0 %v1901
      %v1935 = vpop.f32.mrf.mxu0
      %v1936 = vadd.f32 0.0, %v1935
      %v1937 = vpop.f32.mrf.mxu0
      %v1938 = vadd.f32 0.0, %v1937
      %1939 = vdwg.mxu0
      %v1940 = vadd.f32 %v1861, %v1916
      %v1941 = vadd.f32 %v1862, %v1918
      %v1942 = vadd.f32 %v1863, %v1921
      %v1943 = vadd.f32 %v1864, %v1923
      %v1944 = vadd.f32 %v1865, %v1926
      %v1945 = vadd.f32 %v1866, %v1928
      %v1946 = vadd.f32 %v1867, %v1931
      %v1947 = vadd.f32 %v1868, %v1933
      %v1948 = vadd.f32 %v1869, %v1936
      %v1949 = vadd.f32 %v1870, %v1938
      %v1950 = vld [vmem:[#allocation3 + $0x11] sm:$0xff]
      %v1951 = vld [vmem:[#allocation3 + $0x19] sm:$0xff]
      %v1952 = vld [vmem:[#allocation3 + $0x21] sm:$0xff]
      %v1953 = vld [vmem:[#allocation3 + $0x29] sm:$0xff]
      %v1954 = vld [vmem:[#allocation3 + $0x31] sm:$0xff]
      %v1955 = vld [vmem:[#allocation3 + $0x39] sm:$0xff]
      %v1956 = vld [vmem:[#allocation3 + $0x41] sm:$0xff]
      %v1957 = vld [vmem:[#allocation3 + $0x49] sm:$0xff]
      %v1958 = vld [vmem:[#allocation3 + $0x51] sm:$0xff]
      %v1959 = vld [vmem:[#allocation3 + $0x59] sm:$0xff]
      %v1960 = vpack.c.bf16 %v1951, %v1950
      %v1961 = vpack.c.bf16 %v1953, %v1952
      %v1962 = vpack.c.bf16 %v1955, %v1954
      %v1963 = vpack.c.bf16 %v1957, %v1956
      %v1964 = vpack.c.bf16 %v1959, %v1958
      %s1965 = scalar_lea.vmem %s2, 20
      %v1966 = vld [vmem:[%s1965] sm:$0xf]
      %v1968 = vsel %vm1511, %v1960, 0
      %v1971 = vsel %vm1511, %v1961, 0
      %v1974 = vsel %vm1511, %v1962, 0
      %v1977 = vsel %vm1511, %v1963, 0
      %v1980 = vsel %vm1511, %v1964, 0
      %v1983 = vsel %vm1559, %v1966, 0
      %1985 = vmatpush.bf16.msra.mxu0 0
      %1986 = vmatpush.bf16.msra.mxu0 0
      %1987 = vmatpush.bf16.msra.mxu0 0
      %1988 = vmatpush.bf16.msra.mxu0 0
      %1989 = vmatpush.bf16.msra.mxu0 0
      %1990 = vmatpush.bf16.msra.mxu0 0
      %1991 = vmatpush.bf16.msra.mxu0 0
      %1992 = vmatpush.bf16.msra.mxu0 %v1983
      %1993 = vmatmul.bf16.gmra.mxu0 %v1968
      %v1994 = vpop.f32.mrf.mxu0
      %v1995 = vadd.f32 0.0, %v1994
      %v1996 = vpop.f32.mrf.mxu0
      %v1997 = vadd.f32 0.0, %v1996
      %1998 = vmatmul.bf16.gmra.mxu0 %v1971
      %v1999 = vpop.f32.mrf.mxu0
      %v2000 = vadd.f32 0.0, %v1999
      %v2001 = vpop.f32.mrf.mxu0
      %v2002 = vadd.f32 0.0, %v2001
      %2003 = vmatmul.bf16.gmra.mxu0 %v1974
      %v2004 = vpop.f32.mrf.mxu0
      %v2005 = vadd.f32 0.0, %v2004
      %v2006 = vpop.f32.mrf.mxu0
      %v2007 = vadd.f32 0.0, %v2006
      %2008 = vmatmul.bf16.gmra.mxu0 %v1977
      %v2009 = vpop.f32.mrf.mxu0
      %v2010 = vadd.f32 0.0, %v2009
      %v2011 = vpop.f32.mrf.mxu0
      %v2012 = vadd.f32 0.0, %v2011
      %2013 = vmatmul.bf16.gmra.mxu0 %v1980
      %v2014 = vpop.f32.mrf.mxu0
      %v2015 = vadd.f32 0.0, %v2014
      %v2016 = vpop.f32.mrf.mxu0
      %v2017 = vadd.f32 0.0, %v2016
      %2018 = vdwg.mxu0
      %v2019 = vadd.f32 %v1940, %v1995
      %v2020 = vadd.f32 %v1941, %v1997
      %v2021 = vadd.f32 %v1942, %v2000
      %v2022 = vadd.f32 %v1943, %v2002
      %v2023 = vadd.f32 %v1944, %v2005
      %v2024 = vadd.f32 %v1945, %v2007
      %v2025 = vadd.f32 %v1946, %v2010
      %v2026 = vadd.f32 %v1947, %v2012
      %v2027 = vadd.f32 %v1948, %v2015
      %v2028 = vadd.f32 %v1949, %v2017
      %v2029 = vld [vmem:[#allocation3 + $0x19] sm:$0xff]
      %v2030 = vld [vmem:[#allocation3 + $0x21] sm:$0xff]
      %v2031 = vld [vmem:[#allocation3 + $0x29] sm:$0xff]
      %v2032 = vld [vmem:[#allocation3 + $0x31] sm:$0xff]
      %v2033 = vld [vmem:[#allocation3 + $0x39] sm:$0xff]
      %v2034 = vld [vmem:[#allocation3 + $0x41] sm:$0xff]
      %v2035 = vld [vmem:[#allocation3 + $0x49] sm:$0xff]
      %v2036 = vld [vmem:[#allocation3 + $0x51] sm:$0xff]
      %v2037 = vld [vmem:[#allocation3 + $0x59] sm:$0xff]
      %v2038 = vld [vmem:[#allocation3 + $0x61] sm:$0xff]
      %v2039 = vpack.c.bf16 %v2030, %v2029
      %v2040 = vpack.c.bf16 %v2032, %v2031
      %v2041 = vpack.c.bf16 %v2034, %v2033
      %v2042 = vpack.c.bf16 %v2036, %v2035
      %v2043 = vpack.c.bf16 %v2038, %v2037
      %s2044 = scalar_lea.vmem %s2, 24
      %v2045 = vld [vmem:[%s2044] sm:$0xf]
      %v2047 = vsel %vm1511, %v2039, 0
      %v2050 = vsel %vm1511, %v2040, 0
      %v2053 = vsel %vm1511, %v2041, 0
      %v2056 = vsel %vm1511, %v2042, 0
      %v2059 = vsel %vm1511, %v2043, 0
      %v2062 = vsel %vm1559, %v2045, 0
      %2064 = vmatpush.bf16.msra.mxu0 0
      %2065 = vmatpush.bf16.msra.mxu0 0
      %2066 = vmatpush.bf16.msra.mxu0 0
      %2067 = vmatpush.bf16.msra.mxu0 0
      %2068 = vmatpush.bf16.msra.mxu0 0
      %2069 = vmatpush.bf16.msra.mxu0 0
      %2070 = vmatpush.bf16.msra.mxu0 0
      %2071 = vmatpush.bf16.msra.mxu0 %v2062
      %2072 = vmatmul.bf16.gmra.mxu0 %v2047
      %v2073 = vpop.f32.mrf.mxu0
      %v2074 = vadd.f32 0.0, %v2073
      %v2075 = vpop.f32.mrf.mxu0
      %v2076 = vadd.f32 0.0, %v2075
      %2077 = vmatmul.bf16.gmra.mxu0 %v2050
      %v2078 = vpop.f32.mrf.mxu0
      %v2079 = vadd.f32 0.0, %v2078
      %v2080 = vpop.f32.mrf.mxu0
      %v2081 = vadd.f32 0.0, %v2080
      %2082 = vmatmul.bf16.gmra.mxu0 %v2053
      %v2083 = vpop.f32.mrf.mxu0
      %v2084 = vadd.f32 0.0, %v2083
      %v2085 = vpop.f32.mrf.mxu0
      %v2086 = vadd.f32 0.0, %v2085
      %2087 = vmatmul.bf16.gmra.mxu0 %v2056
      %v2088 = vpop.f32.mrf.mxu0
      %v2089 = vadd.f32 0.0, %v2088
      %v2090 = vpop.f32.mrf.mxu0
      %v2091 = vadd.f32 0.0, %v2090
      %2092 = vmatmul.bf16.gmra.mxu0 %v2059
      %v2093 = vpop.f32.mrf.mxu0
      %v2094 = vadd.f32 0.0, %v2093
      %v2095 = vpop.f32.mrf.mxu0
      %v2096 = vadd.f32 0.0, %v2095
      %2097 = vdwg.mxu0
      %v2098 = vadd.f32 %v2019, %v2074
      %v2099 = vadd.f32 %v2020, %v2076
      %v2100 = vadd.f32 %v2021, %v2079
      %v2101 = vadd.f32 %v2022, %v2081
      %v2102 = vadd.f32 %v2023, %v2084
      %v2103 = vadd.f32 %v2024, %v2086
      %v2104 = vadd.f32 %v2025, %v2089
      %v2105 = vadd.f32 %v2026, %v2091
      %v2106 = vadd.f32 %v2027, %v2094
      %v2107 = vadd.f32 %v2028, %v2096
      %v2108 = vld [vmem:[#allocation3 + $0x1a] sm:$0xff]
      %v2109 = vld [vmem:[#allocation3 + $0x22] sm:$0xff]
      %v2110 = vld [vmem:[#allocation3 + $0x2a] sm:$0xff]
      %v2111 = vld [vmem:[#allocation3 + $0x32] sm:$0xff]
      %v2112 = vld [vmem:[#allocation3 + $0x3a] sm:$0xff]
      %v2113 = vld [vmem:[#allocation3 + $0x42] sm:$0xff]
      %v2114 = vld [vmem:[#allocation3 + $0x4a] sm:$0xff]
      %v2115 = vld [vmem:[#allocation3 + $0x52] sm:$0xff]
      %v2116 = vld [vmem:[#allocation3 + $0x5a] sm:$0xff]
      %v2117 = vld [vmem:[#allocation3 + $0x62] sm:$0xff]
      %v2118 = vpack.c.bf16 %v2109, %v2108
      %v2119 = vpack.c.bf16 %v2111, %v2110
      %v2120 = vpack.c.bf16 %v2113, %v2112
      %v2121 = vpack.c.bf16 %v2115, %v2114
      %v2122 = vpack.c.bf16 %v2117, %v2116
      %s2123 = scalar_lea.vmem %s2, 28
      %v2124 = vld [vmem:[%s2123] sm:$0xf]
      %v2126 = vsel %vm1511, %v2118, 0
      %v2129 = vsel %vm1511, %v2119, 0
      %v2132 = vsel %vm1511, %v2120, 0
      %v2135 = vsel %vm1511, %v2121, 0
      %v2138 = vsel %vm1511, %v2122, 0
      %v2141 = vsel %vm1559, %v2124, 0
      %2143 = vmatpush.bf16.msra.mxu0 0
      %2144 = vmatpush.bf16.msra.mxu0 0
      %2145 = vmatpush.bf16.msra.mxu0 0
      %2146 = vmatpush.bf16.msra.mxu0 0
      %2147 = vmatpush.bf16.msra.mxu0 0
      %2148 = vmatpush.bf16.msra.mxu0 0
      %2149 = vmatpush.bf16.msra.mxu0 0
      %2150 = vmatpush.bf16.msra.mxu0 %v2141
      %2151 = vmatmul.bf16.gmra.mxu0 %v2126
      %v2152 = vpop.f32.mrf.mxu0
      %v2153 = vadd.f32 0.0, %v2152
      %v2154 = vpop.f32.mrf.mxu0
      %v2155 = vadd.f32 0.0, %v2154
      %2156 = vmatmul.bf16.gmra.mxu0 %v2129
      %v2157 = vpop.f32.mrf.mxu0
      %v2158 = vadd.f32 0.0, %v2157
      %v2159 = vpop.f32.mrf.mxu0
      %v2160 = vadd.f32 0.0, %v2159
      %2161 = vmatmul.bf16.gmra.mxu0 %v2132
      %v2162 = vpop.f32.mrf.mxu0
      %v2163 = vadd.f32 0.0, %v2162
      %v2164 = vpop.f32.mrf.mxu0
      %v2165 = vadd.f32 0.0, %v2164
      %2166 = vmatmul.bf16.gmra.mxu0 %v2135
      %v2167 = vpop.f32.mrf.mxu0
      %v2168 = vadd.f32 0.0, %v2167
      %v2169 = vpop.f32.mrf.mxu0
      %v2170 = vadd.f32 0.0, %v2169
      %2171 = vmatmul.bf16.gmra.mxu0 %v2138
      %v2172 = vpop.f32.mrf.mxu0
      %v2173 = vadd.f32 0.0, %v2172
      %v2174 = vpop.f32.mrf.mxu0
      %v2175 = vadd.f32 0.0, %v2174
      %2176 = vdwg.mxu0
      %v2177 = vadd.f32 %v2098, %v2153
      %v2178 = vadd.f32 %v2099, %v2155
      %v2179 = vadd.f32 %v2100, %v2158
      %v2180 = vadd.f32 %v2101, %v2160
      %v2181 = vadd.f32 %v2102, %v2163
      %v2182 = vadd.f32 %v2103, %v2165
      %v2183 = vadd.f32 %v2104, %v2168
      %v2184 = vadd.f32 %v2105, %v2170
      %v2185 = vadd.f32 %v2106, %v2173
      %v2186 = vadd.f32 %v2107, %v2175
      %v2187 = vld [vmem:[#allocation3 + $0x1b] sm:$0xff]
      %v2188 = vld [vmem:[#allocation3 + $0x23] sm:$0xff]
      %v2189 = vld [vmem:[#allocation3 + $0x2b] sm:$0xff]
      %v2190 = vld [vmem:[#allocation3 + $0x33] sm:$0xff]
      %v2191 = vld [vmem:[#allocation3 + $0x3b] sm:$0xff]
      %v2192 = vld [vmem:[#allocation3 + $0x43] sm:$0xff]
      %v2193 = vld [vmem:[#allocation3 + $0x4b] sm:$0xff]
      %v2194 = vld [vmem:[#allocation3 + $0x53] sm:$0xff]
      %v2195 = vld [vmem:[#allocation3 + $0x5b] sm:$0xff]
      %v2196 = vld [vmem:[#allocation3 + $0x63] sm:$0xff]
      %v2197 = vpack.c.bf16 %v2188, %v2187
      %v2198 = vpack.c.bf16 %v2190, %v2189
      %v2199 = vpack.c.bf16 %v2192, %v2191
      %v2200 = vpack.c.bf16 %v2194, %v2193
      %v2201 = vpack.c.bf16 %v2196, %v2195
      %s2202 = scalar_lea.vmem %s2, 32
      %v2203 = vld [vmem:[%s2202] sm:$0xf]
      %v2205 = vsel %vm1511, %v2197, 0
      %v2208 = vsel %vm1511, %v2198, 0
      %v2211 = vsel %vm1511, %v2199, 0
      %v2214 = vsel %vm1511, %v2200, 0
      %v2217 = vsel %vm1511, %v2201, 0
      %v2220 = vsel %vm1559, %v2203, 0
      %2222 = vmatpush.bf16.msra.mxu0 0
      %2223 = vmatpush.bf16.msra.mxu0 0
      %2224 = vmatpush.bf16.msra.mxu0 0
      %2225 = vmatpush.bf16.msra.mxu0 0
      %2226 = vmatpush.bf16.msra.mxu0 0
      %2227 = vmatpush.bf16.msra.mxu0 0
      %2228 = vmatpush.bf16.msra.mxu0 0
      %2229 = vmatpush.bf16.msra.mxu0 %v2220
      %2230 = vmatmul.bf16.gmra.mxu0 %v2205
      %v2231 = vpop.f32.mrf.mxu0
      %v2232 = vadd.f32 0.0, %v2231
      %v2233 = vpop.f32.mrf.mxu0
      %v2234 = vadd.f32 0.0, %v2233
      %2235 = vmatmul.bf16.gmra.mxu0 %v2208
      %v2236 = vpop.f32.mrf.mxu0
      %v2237 = vadd.f32 0.0, %v2236
      %v2238 = vpop.f32.mrf.mxu0
      %v2239 = vadd.f32 0.0, %v2238
      %2240 = vmatmul.bf16.gmra.mxu0 %v2211
      %v2241 = vpop.f32.mrf.mxu0
      %v2242 = vadd.f32 0.0, %v2241
      %v2243 = vpop.f32.mrf.mxu0
      %v2244 = vadd.f32 0.0, %v2243
      %2245 = vmatmul.bf16.gmra.mxu0 %v2214
      %v2246 = vpop.f32.mrf.mxu0
      %v2247 = vadd.f32 0.0, %v2246
      %v2248 = vpop.f32.mrf.mxu0
      %v2249 = vadd.f32 0.0, %v2248
      %2250 = vmatmul.bf16.gmra.mxu0 %v2217
      %v2251 = vpop.f32.mrf.mxu0
      %v2252 = vadd.f32 0.0, %v2251
      %v2253 = vpop.f32.mrf.mxu0
      %v2254 = vadd.f32 0.0, %v2253
      %2255 = vdwg.mxu0
      %v2256 = vadd.f32 %v2177, %v2232
      %v2257 = vadd.f32 %v2178, %v2234
      %v2258 = vadd.f32 %v2179, %v2237
      %v2259 = vadd.f32 %v2180, %v2239
      %v2260 = vadd.f32 %v2181, %v2242
      %v2261 = vadd.f32 %v2182, %v2244
      %v2262 = vadd.f32 %v2183, %v2247
      %v2263 = vadd.f32 %v2184, %v2249
      %v2264 = vadd.f32 %v2185, %v2252
      %v2265 = vadd.f32 %v2186, %v2254
      %v2266 = vld [vmem:[%s5] sm:$0x1]
      %v2268 = vperm.slane %v2266, 0
      %v2270 = vadd.f32 %v2256, %v2268
      %v2271 = vadd.f32 %v2257, %v2268
      %v2272 = vadd.f32 %v2258, %v2268
      %v2273 = vadd.f32 %v2259, %v2268
      %v2274 = vadd.f32 %v2260, %v2268
      %v2275 = vadd.f32 %v2261, %v2268
      %v2276 = vadd.f32 %v2262, %v2268
      %v2277 = vadd.f32 %v2263, %v2268
      %v2278 = vadd.f32 %v2264, %v2268
      %v2279 = vadd.f32 %v2265, %v2268
      %v2280 = vmax.f32 %v2270, 0.0
      %v2281 = vmax.f32 %v2271, 0.0
      %v2282 = vmax.f32 %v2272, 0.0
      %v2283 = vmax.f32 %v2273, 0.0
      %v2284 = vmax.f32 %v2274, 0.0
      %v2285 = vmax.f32 %v2275, 0.0
      %v2286 = vmax.f32 %v2276, 0.0
      %v2287 = vmax.f32 %v2277, 0.0
      %v2288 = vmax.f32 %v2278, 0.0
      %v2289 = vmax.f32 %v2279, 0.0
      %2290 = vst.msk [vmem:[%s251] sm:$0xff] %vm1511, %v2280
      %2291 = vst.msk [vmem:[%s251 + $0x8] sm:$0xff] %vm1511, %v2281
      %2292 = vst.msk [vmem:[%s251 + $0x10] sm:$0xff] %vm1511, %v2282
      %2293 = vst.msk [vmem:[%s251 + $0x18] sm:$0xff] %vm1511, %v2283
      %2294 = vst.msk [vmem:[%s251 + $0x20] sm:$0xff] %vm1511, %v2284
      %2295 = vst.msk [vmem:[%s251 + $0x28] sm:$0xff] %vm1511, %v2285
      %2296 = vst.msk [vmem:[%s251 + $0x30] sm:$0xff] %vm1511, %v2286
      %2297 = vst.msk [vmem:[%s251 + $0x38] sm:$0xff] %vm1511, %v2287
      %2298 = vst.msk [vmem:[%s251 + $0x40] sm:$0xff] %vm1511, %v2288
      %2299 = vst.msk [vmem:[%s251 + $0x48] sm:$0xff] %vm1511, %v2289
      %p2300 = scmp.lt.s32.totalorder %s17, 1
      %s2301 = scalar_select %p2300, %s17, 1
      %s2302 = smul.addr %s2301, 10
      %s2303 = smul.addr %s2302, 8
      %s2304 = scalar_lea.vmem %s6, %s2303
      // Predicated region
      $region45: #{res_block_p.1} parent=43 // pred_check
        %p2305 = pneg %p166
      $region46: #{res_block_p.1} parent=43 // pred_check_branch
        %2307 = sbr.rel (%p2305) target = $region48
      $region47: #{res_block_p.1} parent=43 // pred_region
        _
      $region48: #{res_block_p.1} parent=43 // pred_fallthru
        _
    $region44: #{res_block_p.1} parent=5 // pred_fallthru
      _
    %p2308 = scmp.le.s32.totalorder 2, %s12
    // Predicated region
    $region49: #{res_block_p.1} parent=5 // pred_check
      %p2309 = pneg %p2308
    $region50: #{res_block_p.1} parent=5 // pred_check_branch
      %2311 = sbr.rel (%p2309) target = $region52
    $region51: #{res_block_p.1} parent=5 // pred_region
      %s2312 = ssub.s32 %s12, 2
      // Predicated region
      $region53: #{res_block_p.1} parent=51 // pred_check
        %p2313 = pneg %p172
      $region54: #{res_block_p.1} parent=51 // pred_check_branch
        %2315 = sbr.rel (%p2313) target = $region56
      $region55: #{res_block_p.1} parent=51 // pred_region
        %p2316 = scmp.lt.s32.totalorder %s18, 1
        %s2317 = scalar_select %p2316, %s18, 1
        %s2318 = smul.addr %s2317, 10
        %s2319 = smul.addr %s2318, 8
        %s2320 = scalar_lea.vmem %s6, %s2319
      $region56: #{res_block_p.1} parent=51 // pred_fallthru
        _
    $region52: #{res_block_p.1} parent=5 // pred_fallthru
      _
  $region6: #{res_block_p.1} parent=0 // loop_footer
    %s16 = sadd.s32 1, %s12
  $region7: #{res_block_p.1} parent=0 // loop_footer_branch
    %11 = sbr.rel target = $region3
  $region8: #{res_block_p.1} parent=0 // loop_exit
    _

</llo_original>
